<compile_context>
chip_gen: v7x
topology: tpu7x:2x2x1
jax: 0.10.0
libtpu: 0.0.40
codegen_flags: <defaults>
</compile_context>

<pallas_src>
import numpy as np

import jax
import jax.numpy as jnp
from jax.experimental import pallas as pl
from jax.experimental.pallas import tpu as pltpu


def _param_layout(lanes, ks):
    """Row offsets inside the single concatenated parameter slab."""
    dw_rows = ((ks * ks + 7) // 8) * 8          # depthwise taps, padded to 8 rows
    off_exp = 0                                 # (lanes, lanes) expand block-diag
    off_proj = lanes                            # (lanes, lanes) project block-diag
    off_dw = 2 * lanes                          # ks*ks tap rows
    off_b = off_dw + dw_rows                    # b1, b2, b3 rows
    total = off_b + 8
    return off_exp, off_proj, off_dw, off_b, total


def _make_kernel(H, W, hidden, ks, pad, use_res):
    """Kernel over one block of whole images; refs are (rows, W*hidden) slabs."""
    lanes = W * hidden
    off_exp, off_proj, off_dw, off_b, _ = _param_layout(lanes, ks)

    def kernel(x_ref, p_ref, o_ref):
        x = x_ref[...]                                   # (rows, lanes)
        rows = x.shape[0]

        # Parameter views (one DMA'd slab, static row offsets).
        w_exp = p_ref[pl.ds(off_exp, lanes), :]          # (lanes, lanes)
        w_proj = p_ref[pl.ds(off_proj, lanes), :]        # (lanes, lanes)
        b1 = p_ref[pl.ds(off_b + 0, 1), :]               # (1, lanes)
        b2 = p_ref[pl.ds(off_b + 1, 1), :]
        b3 = p_ref[pl.ds(off_b + 2, 1), :]

        # ---- 1x1 expand + folded BN + ReLU: block-diagonal MXU matmul ----
        h = jnp.dot(x, w_exp, preferred_element_type=jnp.float32,
                    precision=jax.lax.Precision.HIGHEST) + b1
        h = jnp.maximum(h, 0.0)                          # (rows, lanes)

        # ---- depthwise ks x ks, stride 1 + folded BN + ReLU ----
        # Horizontal taps: ks-1 lane rolls of +-hidden, computed once and
        # reused for every dh (W-edge masks are folded into the tap weights).
        h_w = []
        for dw in range(ks):
            off_w = dw - pad
            shift = (-off_w * hidden) % lanes
            h_w.append(h if shift == 0 else pltpu.roll(h, shift, axis=1))

        # Vertical-border mask support, hoisted out of the tap loops.  A block
        # stacks whole images on the row axis, so this also kills cross-image
        # rows introduced by the sublane roll.
        row_in_img = jax.lax.broadcasted_iota(jnp.int32, (rows, 1), 0) % H

        acc = b2                                         # broadcasts up
        for dh in range(ks):
            off_h = dh - pad
            # Per-dh horizontal weighted sum first (VPU FMAs only) ...
            g = None
            for dw in range(ks):
                wtap = p_ref[pl.ds(off_dw + dh * ks + dw, 1), :]   # (1, lanes)
                term = h_w[dw] * wtap
                g = term if g is None else g + term
            # ... then at most ONE sublane roll + ONE mask multiply per dh.
            if off_h == 0:
                acc = acc + g
            else:
                rolled = pltpu.roll(g, (-off_h) % rows, axis=0)
                valid = ((row_in_img + off_h >= 0) &
                         (row_in_img + off_h < H)).astype(g.dtype)
                acc = acc + rolled * valid
        acc = jnp.maximum(acc, 0.0)

        # ---- 1x1 project + folded BN (+ residual): block-diagonal MXU matmul ----
        y = jnp.dot(acc, w_proj, preferred_element_type=jnp.float32,
                    precision=jax.lax.Precision.HIGHEST) + b3
        if use_res:
            # Cin == Cout lanes line up; unused lanes are zero on both sides.
            y = y + x
        o_ref[...] = y.astype(o_ref.dtype)

    return kernel


def inverted_residual_forward(x_nchw, w_expand, s1, b1, w_dw, s2, b2,
                              w_proj, s3, b3, *, ks, stride,
                              images_per_block=None):
    assert stride == 1, "kernel implements the stride=1 (residual) branch"
    N, Cin, H, W = x_nchw.shape
    hidden = w_expand.shape[1]
    Cout = w_proj.shape[1]
    pad = ks // 2
    use_res = (stride == 1) and (Cin == Cout)
    assert Cin <= hidden and Cout <= hidden, (
        "channel groups must fit inside the hidden-wide lane group")

    if images_per_block is None:
        images_per_block = N      # fold the whole batch: best on 1-TC chips
    assert N % images_per_block == 0

    f32 = jnp.float32
    lanes = W * hidden
    rows = N * H
    rows_per_block = images_per_block * H
    # Lane-dense / unmasked-store requirements (perf-review correctness note).
    assert lanes % 128 == 0, "W*hidden must be a multiple of 128 lanes"
    assert rows_per_block % 8 == 0, "rows per block must be a multiple of 8"

    s1 = s1.reshape(-1).astype(f32); b1 = b1.reshape(-1).astype(f32)
    s2 = s2.reshape(-1).astype(f32); b2 = b2.reshape(-1).astype(f32)
    s3 = s3.reshape(-1).astype(f32); b3 = b3.reshape(-1).astype(f32)

    # ---- fold eval-mode BatchNorm into the conv weights (wrapper-side) ----
    w1f = w_expand.astype(f32) * s1[None, :]            # (Cin, hidden)
    wdwf = w_dw.astype(f32) * s2[None, None, :]         # (ks, ks, hidden)
    w2f = w_proj.astype(f32) * s3[None, :]              # (hidden, Cout)

    # ---- lane-dense input: pad channels Cin -> hidden, (W, hidden) -> lanes ----
    x_nhwc = jnp.transpose(x_nchw, (0, 2, 3, 1)).astype(f32)
    x_wide = jnp.pad(x_nhwc, ((0, 0), (0, 0), (0, 0), (0, hidden - Cin)))
    x_wide = x_wide.reshape(rows, lanes)

    # ---- block-diagonal (lanes, lanes) 1x1-conv matrices for the MXU ----
    w1_pad = jnp.zeros((hidden, hidden), f32).at[:Cin, :].set(w1f)
    w2_pad = jnp.zeros((hidden, hidden), f32).at[:, :Cout].set(w2f)
    eye_w = jnp.eye(W, dtype=f32)
    w_exp_blk = jnp.kron(eye_w, w1_pad)                 # (lanes, lanes)
    w_proj_blk = jnp.kron(eye_w, w2_pad)                # (lanes, lanes)

    # ---- depthwise taps: tile over W, fold the horizontal edge mask in ----
    lane_w = np.arange(lanes) // hidden                 # column per lane
    dw_off = (np.arange(ks * ks) % ks) - pad            # (ks*ks,)
    in_range = ((lane_w[None, :] + dw_off[:, None]) >= 0) & \
               ((lane_w[None, :] + dw_off[:, None]) < W)
    wdw_lane = jnp.where(jnp.asarray(in_range),
                         jnp.tile(wdwf.reshape(ks * ks, hidden), (1, W)), 0.0)

    # ---- lane-tiled biases ----
    b1_lane = jnp.tile(b1.reshape(1, hidden), (1, W))
    b2_lane = jnp.tile(b2.reshape(1, hidden), (1, W))
    b3_lane = jnp.tile(jnp.pad(b3, (0, hidden - Cout)).reshape(1, hidden), (1, W))

    # ---- single concatenated parameter slab (one DMA / one VMEM buffer) ----
    off_exp, off_proj, off_dw, off_b, n_param_rows = _param_layout(lanes, ks)
    dw_rows = off_b - off_dw
    params = jnp.concatenate([
        w_exp_blk,
        w_proj_blk,
        wdw_lane, jnp.zeros((dw_rows - ks * ks, lanes), f32),
        b1_lane, b2_lane, b3_lane, jnp.zeros((8 - 3, lanes), f32),
    ], axis=0)
    assert params.shape == (n_param_rows, lanes)

    kernel = _make_kernel(H, W, hidden, ks, pad, use_res)

    x_spec = pl.BlockSpec((rows_per_block, lanes), lambda i: (i, 0))
    p_spec = pl.BlockSpec((n_param_rows, lanes), lambda i: (0, 0))

    out_wide = pl.pallas_call(
        kernel,
        out_shape=jax.ShapeDtypeStruct((rows, lanes), x_nchw.dtype),
        grid=(N // images_per_block,),
        in_specs=[x_spec, p_spec],
        out_specs=x_spec,
        compiler_params=pltpu.CompilerParams(
            dimension_semantics=("parallel",)),
    )(x_wide, params)

    # lane-dense slab -> NCHW (wrapper-side layout plumbing only)
    out = out_wide.reshape(N, H, W, hidden)[..., :Cout]
    return jnp.transpose(out, (0, 3, 1, 2))


def _bn_scale_bias(key, c, eps=1e-5):
    # Eval-mode BatchNorm fold with non-trivial (random) running statistics.
    kg, kb, km, kv = jax.random.split(key, 4)
    gamma = 1.0 + 0.1 * jax.random.normal(kg, (c,), jnp.float32)
    beta = 0.1 * jax.random.normal(kb, (c,), jnp.float32)
    mean = 0.1 * jax.random.normal(km, (c,), jnp.float32)
    var = jax.random.uniform(kv, (c,), jnp.float32, minval=0.5, maxval=1.5)
    scale = gamma / jnp.sqrt(var + eps)
    bias = beta - mean * scale
    return scale, bias


if __name__ == "__main__":
    # Module config: InvertedResidual(inp=4, oup=4, ks=3, stride=1, expand_ratio=2)
    N, Cin, H, W = 2, 4, 16, 16
    oup, ks, stride, expand_ratio = 4, 3, 1, 2
    hidden = int(round(Cin * expand_ratio))   # 8 -> W*hidden = 128 lanes

    key = jax.random.PRNGKey(0)
    k_x, k_e, k_d, k_p, k_b1, k_b2, k_b3 = jax.random.split(key, 7)
    x_nchw = jax.random.normal(k_x, (N, Cin, H, W), jnp.float32)

    # Conv weights in the kernel's layouts:
    #   expand (Cin, hidden), depthwise (ks, ks, hidden), project (hidden, oup)
    w_expand = 0.1 * jax.random.normal(k_e, (Cin, hidden), jnp.float32)
    w_dw = 0.1 * jax.random.normal(k_d, (ks, ks, hidden), jnp.float32)
    w_proj = 0.1 * jax.random.normal(k_p, (hidden, oup), jnp.float32)

    s1, b1 = _bn_scale_bias(k_b1, hidden)
    s2, b2 = _bn_scale_bias(k_b2, hidden)
    s3, b3 = _bn_scale_bias(k_b3, oup)

    out = inverted_residual_forward(
        x_nchw, w_expand, s1, b1, w_dw, s2, b2, w_proj, s3, b3,
        ks=ks, stride=stride)
    out = jax.block_until_ready(out)

    # ---- pure-JAX reference (independent path via lax.conv) ----
    x_nhwc = jnp.transpose(x_nchw, (0, 2, 3, 1))
    h = jnp.einsum("nhwc,cd->nhwd", x_nhwc, w_expand) * s1 + b1
    h = jnp.maximum(h, 0.0)
    dw_hwio = w_dw.reshape(ks, ks, 1, hidden)
    hd = jax.lax.conv_general_dilated(
        h, dw_hwio, window_strides=(1, 1),
        padding=((ks // 2, ks // 2), (ks // 2, ks // 2)),
        dimension_numbers=("NHWC", "HWIO", "NHWC"),
        feature_group_count=hidden)
    hd = jnp.maximum(hd * s2 + b2, 0.0)
    y = jnp.einsum("nhwc,cd->nhwd", hd, w_proj) * s3 + b3
    ref = jnp.transpose(x_nhwc + y, (0, 3, 1, 2))   # residual branch, NCHW

    assert out.shape == (N, oup, H, W)
    assert jnp.allclose(out, ref, atol=2e-3, rtol=2e-3), "mismatch vs reference"
    print("KERNEL_OK")
</pallas_src>

<mosaic_0001>
module attributes {stable_mosaic.version = 11 : i64} {
  func.func @kernel(%arg0: i32, %arg1: memref<32x128xf32, #tpu.memory_space<vmem>>, %arg2: memref<280x128xf32, #tpu.memory_space<vmem>>, %arg3: memref<32x128xf32, #tpu.memory_space<vmem>>) attributes {dimension_semantics = [#tpu.dimension_semantics<parallel>], iteration_bounds = array<i64: 1>, scalar_prefetch = 0 : i64, scratch_operands = 0 : i64, tpu.core_type = #tpu.core_type<tc>, window_params = [{transform_indices = @transform_0, window_bounds = array<i64: 32, 128>}, {pipeline_mode = #tpu.pipeline_mode<synchronous>, transform_indices = @transform_1, window_bounds = array<i64: 280, 128>}, {transform_indices = @transform_2, window_bounds = array<i64: 32, 128>}]} {
    %c0 = arith.constant 0 : index
    %c0_0 = arith.constant 0 : index
    %0 = vector.load %arg1[%c0, %c0_0] : memref<32x128xf32, #tpu.memory_space<vmem>>, vector<32x128xf32>
    %c0_1 = arith.constant 0 : index
    %c0_2 = arith.constant 0 : index
    %1 = vector.load %arg2[%c0_1, %c0_2] : memref<280x128xf32, #tpu.memory_space<vmem>>, vector<128x128xf32>
    %c128 = arith.constant 128 : index
    %c0_3 = arith.constant 0 : index
    %2 = vector.load %arg2[%c128, %c0_3] : memref<280x128xf32, #tpu.memory_space<vmem>>, vector<128x128xf32>
    %c272 = arith.constant 272 : index
    %c0_4 = arith.constant 0 : index
    %3 = vector.load %arg2[%c272, %c0_4] : memref<280x128xf32, #tpu.memory_space<vmem>>, vector<1x128xf32>
    %c273 = arith.constant 273 : index
    %c0_5 = arith.constant 0 : index
    %4 = vector.load %arg2[%c273, %c0_5] : memref<280x128xf32, #tpu.memory_space<vmem>>, vector<1x128xf32>
    %c274 = arith.constant 274 : index
    %c0_6 = arith.constant 0 : index
    %5 = vector.load %arg2[%c274, %c0_6] : memref<280x128xf32, #tpu.memory_space<vmem>>, vector<1x128xf32>
    %cst = arith.constant dense<0.000000e+00> : vector<32x128xf32>
    %6 = tpu.matmul %0, %1, %cst {dimension_numbers = #tpu.dot_dimension_numbers<[1], [0], [0], [1], [0, 0, 1, 1], [], []>, precision = #tpu.contract_precision<fp32>} : vector<32x128xf32>, vector<128x128xf32>, vector<32x128xf32> -> vector<32x128xf32>
    %7 = vector.broadcast %3 : vector<1x128xf32> to vector<32x128xf32>
    %8 = arith.addf %6, %7 : vector<32x128xf32>
    %cst_7 = arith.constant 0.000000e+00 : f32
    %9 = vector.broadcast %cst_7 : f32 to vector<32x128xf32>
    %10 = arith.maximumf %8, %9 : vector<32x128xf32>
    %c8_i32 = arith.constant 8 : i32
    %11 = tpu.dynamic_rotate %10 by %c8_i32 dim 1 : vector<32x128xf32>, i32 -> vector<32x128xf32>
    %c120_i32 = arith.constant 120 : i32
    %12 = tpu.dynamic_rotate %10 by %c120_i32 dim 1 : vector<32x128xf32>, i32 -> vector<32x128xf32>
    %13 = tpu.iota {dimensions = array<i32: 0>} : vector<32x1xi32>
    %c16_i32 = arith.constant 16 : i32
    %c0_i32 = arith.constant 0 : i32
    %14 = arith.cmpi eq, %c16_i32, %c0_i32 : i32
    %c1_i32 = arith.constant 1 : i32
    %15 = arith.select %14, %c1_i32, %c16_i32 : i32
    %16 = vector.broadcast %15 : i32 to vector<32x1xi32>
    %17 = arith.remsi %13, %16 : vector<32x1xi32>
    %c0_i32_8 = arith.constant 0 : i32
    %18 = vector.broadcast %c0_i32_8 : i32 to vector<32x1xi32>
    %19 = arith.cmpi ne, %17, %18 : vector<32x1xi32>
    %c0_i32_9 = arith.constant 0 : i32
    %20 = vector.broadcast %c0_i32_9 : i32 to vector<32x1xi32>
    %21 = arith.cmpi slt, %17, %20 : vector<32x1xi32>
    %c0_i32_10 = arith.constant 0 : i32
    %22 = arith.cmpi slt, %15, %c0_i32_10 : i32
    %23 = vector.broadcast %22 : i1 to vector<32x1xi1>
    %24 = vector.broadcast %23 : vector<32x1xi1> to vector<32x1xi1>
    %25 = arith.xori %21, %24 : vector<32x1xi1>
    %26 = arith.andi %25, %19 : vector<32x1xi1>
    %27 = vector.broadcast %15 : i32 to vector<32x1xi32>
    %28 = arith.addi %17, %27 : vector<32x1xi32>
    %29 = arith.select %26, %28, %17 : vector<32x1xi1>, vector<32x1xi32>
    %c256 = arith.constant 256 : index
    %c0_11 = arith.constant 0 : index
    %30 = vector.load %arg2[%c256, %c0_11] : memref<280x128xf32, #tpu.memory_space<vmem>>, vector<1x128xf32>
    %31 = vector.broadcast %30 : vector<1x128xf32> to vector<32x128xf32>
    %32 = arith.mulf %11, %31 : vector<32x128xf32>
    %c257 = arith.constant 257 : index
    %c0_12 = arith.constant 0 : index
    %33 = vector.load %arg2[%c257, %c0_12] : memref<280x128xf32, #tpu.memory_space<vmem>>, vector<1x128xf32>
    %34 = vector.broadcast %33 : vector<1x128xf32> to vector<32x128xf32>
    %35 = arith.mulf %10, %34 : vector<32x128xf32>
    %36 = arith.addf %32, %35 : vector<32x128xf32>
    %c258 = arith.constant 258 : index
    %c0_13 = arith.constant 0 : index
    %37 = vector.load %arg2[%c258, %c0_13] : memref<280x128xf32, #tpu.memory_space<vmem>>, vector<1x128xf32>
    %38 = vector.broadcast %37 : vector<1x128xf32> to vector<32x128xf32>
    %39 = arith.mulf %12, %38 : vector<32x128xf32>
    %40 = arith.addf %36, %39 : vector<32x128xf32>
    %c1_i32_14 = arith.constant 1 : i32
    %41 = tpu.dynamic_rotate %40 by %c1_i32_14 dim 0 : vector<32x128xf32>, i32 -> vector<32x128xf32>
    %c-1_i32 = arith.constant -1 : i32
    %42 = vector.broadcast %c-1_i32 : i32 to vector<32x1xi32>
    %43 = arith.addi %29, %42 : vector<32x1xi32>
    %c0_i32_15 = arith.constant 0 : i32
    %44 = vector.broadcast %c0_i32_15 : i32 to vector<32x1xi32>
    %45 = arith.cmpi sge, %43, %44 : vector<32x1xi32>
    %c-1_i32_16 = arith.constant -1 : i32
    %46 = vector.broadcast %c-1_i32_16 : i32 to vector<32x1xi32>
    %47 = arith.addi %29, %46 : vector<32x1xi32>
    %c16_i32_17 = arith.constant 16 : i32
    %48 = vector.broadcast %c16_i32_17 : i32 to vector<32x1xi32>
    %49 = arith.cmpi slt, %47, %48 : vector<32x1xi32>
    %50 = arith.andi %45, %49 : vector<32x1xi1>
    %51 = arith.extui %50 : vector<32x1xi1> to vector<32x1xi32>
    %52 = arith.sitofp %51 : vector<32x1xi32> to vector<32x1xf32>
    %53 = vector.broadcast %52 : vector<32x1xf32> to vector<32x128xf32>
    %54 = arith.mulf %41, %53 : vector<32x128xf32>
    %55 = vector.broadcast %4 : vector<1x128xf32> to vector<32x128xf32>
    %56 = arith.addf %55, %54 : vector<32x128xf32>
    %c259 = arith.constant 259 : index
    %c0_18 = arith.constant 0 : index
    %57 = vector.load %arg2[%c259, %c0_18] : memref<280x128xf32, #tpu.memory_space<vmem>>, vector<1x128xf32>
    %58 = vector.broadcast %57 : vector<1x128xf32> to vector<32x128xf32>
    %59 = arith.mulf %11, %58 : vector<32x128xf32>
    %c260 = arith.constant 260 : index
    %c0_19 = arith.constant 0 : index
    %60 = vector.load %arg2[%c260, %c0_19] : memref<280x128xf32, #tpu.memory_space<vmem>>, vector<1x128xf32>
    %61 = vector.broadcast %60 : vector<1x128xf32> to vector<32x128xf32>
    %62 = arith.mulf %10, %61 : vector<32x128xf32>
    %63 = arith.addf %59, %62 : vector<32x128xf32>
    %c261 = arith.constant 261 : index
    %c0_20 = arith.constant 0 : index
    %64 = vector.load %arg2[%c261, %c0_20] : memref<280x128xf32, #tpu.memory_space<vmem>>, vector<1x128xf32>
    %65 = vector.broadcast %64 : vector<1x128xf32> to vector<32x128xf32>
    %66 = arith.mulf %12, %65 : vector<32x128xf32>
    %67 = arith.addf %63, %66 : vector<32x128xf32>
    %68 = arith.addf %56, %67 : vector<32x128xf32>
    %c262 = arith.constant 262 : index
    %c0_21 = arith.constant 0 : index
    %69 = vector.load %arg2[%c262, %c0_21] : memref<280x128xf32, #tpu.memory_space<vmem>>, vector<1x128xf32>
    %70 = vector.broadcast %69 : vector<1x128xf32> to vector<32x128xf32>
    %71 = arith.mulf %11, %70 : vector<32x128xf32>
    %c263 = arith.constant 263 : index
    %c0_22 = arith.constant 0 : index
    %72 = vector.load %arg2[%c263, %c0_22] : memref<280x128xf32, #tpu.memory_space<vmem>>, vector<1x128xf32>
    %73 = vector.broadcast %72 : vector<1x128xf32> to vector<32x128xf32>
    %74 = arith.mulf %10, %73 : vector<32x128xf32>
    %75 = arith.addf %71, %74 : vector<32x128xf32>
    %c264 = arith.constant 264 : index
    %c0_23 = arith.constant 0 : index
    %76 = vector.load %arg2[%c264, %c0_23] : memref<280x128xf32, #tpu.memory_space<vmem>>, vector<1x128xf32>
    %77 = vector.broadcast %76 : vector<1x128xf32> to vector<32x128xf32>
    %78 = arith.mulf %12, %77 : vector<32x128xf32>
    %79 = arith.addf %75, %78 : vector<32x128xf32>
    %c31_i32 = arith.constant 31 : i32
    %80 = tpu.dynamic_rotate %79 by %c31_i32 dim 0 : vector<32x128xf32>, i32 -> vector<32x128xf32>
    %c1_i32_24 = arith.constant 1 : i32
    %81 = vector.broadcast %c1_i32_24 : i32 to vector<32x1xi32>
    %82 = arith.addi %29, %81 : vector<32x1xi32>
    %c0_i32_25 = arith.constant 0 : i32
    %83 = vector.broadcast %c0_i32_25 : i32 to vector<32x1xi32>
    %84 = arith.cmpi sge, %82, %83 : vector<32x1xi32>
    %c1_i32_26 = arith.constant 1 : i32
    %85 = vector.broadcast %c1_i32_26 : i32 to vector<32x1xi32>
    %86 = arith.addi %29, %85 : vector<32x1xi32>
    %c16_i32_27 = arith.constant 16 : i32
    %87 = vector.broadcast %c16_i32_27 : i32 to vector<32x1xi32>
    %88 = arith.cmpi slt, %86, %87 : vector<32x1xi32>
    %89 = arith.andi %84, %88 : vector<32x1xi1>
    %90 = arith.extui %89 : vector<32x1xi1> to vector<32x1xi32>
    %91 = arith.sitofp %90 : vector<32x1xi32> to vector<32x1xf32>
    %92 = vector.broadcast %91 : vector<32x1xf32> to vector<32x128xf32>
    %93 = arith.mulf %80, %92 : vector<32x128xf32>
    %94 = arith.addf %68, %93 : vector<32x128xf32>
    %cst_28 = arith.constant 0.000000e+00 : f32
    %95 = vector.broadcast %cst_28 : f32 to vector<32x128xf32>
    %96 = arith.maximumf %94, %95 : vector<32x128xf32>
    %cst_29 = arith.constant dense<0.000000e+00> : vector<32x128xf32>
    %97 = tpu.matmul %96, %2, %cst_29 {dimension_numbers = #tpu.dot_dimension_numbers<[1], [0], [0], [1], [0, 0, 1, 1], [], []>, precision = #tpu.contract_precision<fp32>} : vector<32x128xf32>, vector<128x128xf32>, vector<32x128xf32> -> vector<32x128xf32>
    %98 = vector.broadcast %5 : vector<1x128xf32> to vector<32x128xf32>
    %99 = arith.addf %97, %98 : vector<32x128xf32>
    %100 = arith.addf %99, %0 : vector<32x128xf32>
    %c0_30 = arith.constant 0 : index
    %c0_31 = arith.constant 0 : index
    %101 = vector.load %arg3[%c0_30, %c0_31] : memref<32x128xf32, #tpu.memory_space<vmem>>, vector<32x128xf32>
    tpu.vector_store %arg3[%c0_30, %c0_31], %100 {strides = array<i32>} : memref<32x128xf32, #tpu.memory_space<vmem>>, vector<32x128xf32>,
    return
  }
  func.func @transform_0(%arg0: i32) -> (i32, i32) {
    %c0_i32 = arith.constant 0 : i32
    %c0_i32_0 = arith.constant 0 : i32
    return %arg0, %c0_i32 : i32, i32
  }
  func.func @transform_1(%arg0: i32) -> (i32, i32) {
    %c0_i32 = arith.constant 0 : i32
    %c0_i32_0 = arith.constant 0 : i32
    %c0_i32_1 = arith.constant 0 : i32
    return %c0_i32, %c0_i32_0 : i32, i32
  }
  func.func @transform_2(%arg0: i32) -> (i32, i32) {
    %c0_i32 = arith.constant 0 : i32
    %c0_i32_0 = arith.constant 0 : i32
    return %arg0, %c0_i32 : i32, i32
  }
}

</mosaic_0001>

<llo_original>
// kernel: tpu_custom_call.1
$region0: #{tpu_custom_call.1}
  #allocation0 [shape = 'u32[]', space=smem, size = 0x4, offset = 0x4, fixed_abs, tag = 'smem constant byte address 0x4 - core index']
  #allocation1 [shape = 'u32[144,128]{1,0:T(1,128)}', space=vmem, size = 0x12000, scoped, tag = 'internal scratch']
  %s0 = inlined_call_operand.hbm [shape: f32[32,128], index: 0, kind: input, shape index: {}]
  %s1 = inlined_call_operand.hbm [shape: f32[280,128], index: 1, kind: input, shape index: {}]
  %s2 = inlined_call_operand.hbm [shape: f32[32,128], index: 2, kind: output, shape index: {}]
  %s3 = sld [smem:[#allocation0]]
  $region26: #{tpu_custom_call.1} parent=0
    _
  %s5 = ssub.s32 1, %s3
  %s6 = scalar_select 0, %s5, %s3
  $region1: #{tpu_custom_call.1} parent=0
    #allocation2 [shape = 'u8[16384]{0}', space=vmem, size = 0x4000, scoped, tag = 'input window, operand 0, single buffered']
    #allocation3 [shape = 's32[1]{0}', space=sflag, size = 0x4, scoped, tag = 'scoped memory for tpu_custom_call.1']
    #allocation4 [shape = 's32[1]{0}', space=sflag, size = 0x4, scoped, tag = 'scoped memory for tpu_custom_call.1']
    #allocation5 [shape = 'u8[143360]{0}', space=vmem, size = 0x23000, scoped, tag = 'input window, operand 1, single buffered']
    #allocation6 [shape = 's32[1]{0}', space=sflag, size = 0x4, scoped, tag = 'scoped memory for tpu_custom_call.1']
    #allocation7 [shape = 'u8[16384]{0}', space=vmem, size = 0x4000, scoped, tag = 'output window, operand 0, single buffered']
    %7 = vsyncpa [#allocation3], 0
    %8 = vsyncpa [#allocation6], 0
    %9 = vsyncpa [#allocation4], 0
    // Predicated region
    $region2: #{tpu_custom_call.1} parent=1 // pred_check
      _
    $region3: #{tpu_custom_call.1} parent=1 // pred_check_branch
      %11 = sbr.rel (0) target = $region5
    $region4: #{tpu_custom_call.1} parent=1 // pred_region
      %s13 = ssub.s32 512, 512
      %14 = vsyncadd [#allocation3], %s13
      %s15 = sshll.u32 [#allocation2], 4
      %s16 = int_to_ptr.vmem [resolvable:$true] %s15
      %21 = dma.hbm_to_vmem [thread:$0]  %s0, 512, %s16, [#allocation3], 128, 128, 8
    $region5: #{tpu_custom_call.1} parent=1 // pred_fallthru
      _
    // Predicated region
    $region6: #{tpu_custom_call.1} parent=1 // pred_check
      _
    $region7: #{tpu_custom_call.1} parent=1 // pred_check_branch
      %23 = sbr.rel (0) target = $region9
    $region8: #{tpu_custom_call.1} parent=1 // pred_region
      %s25 = ssub.s32 4480, 4480
      %26 = vsyncadd [#allocation6], %s25
      %s27 = sshll.u32 [#allocation5], 4
      %s28 = int_to_ptr.vmem [resolvable:$true] %s27
      %33 = dma.hbm_to_vmem [thread:$0]  %s1, 4480, %s28, [#allocation6], 128, 128, 8
    $region9: #{tpu_custom_call.1} parent=1 // pred_fallthru
      _
    // Predicated region
    $region10: #{tpu_custom_call.1} parent=1 // pred_check
      _
    $region11: #{tpu_custom_call.1} parent=1 // pred_check_branch
      %35 = sbr.rel (0) target = $region13
    $region12: #{tpu_custom_call.1} parent=1 // pred_region
      %36 = dma.done [#allocation3], 512
    $region13: #{tpu_custom_call.1} parent=1 // pred_fallthru
      _
    // Predicated region
    $region14: #{tpu_custom_call.1} parent=1 // pred_check
      _
    $region15: #{tpu_custom_call.1} parent=1 // pred_check_branch
      %38 = sbr.rel (0) target = $region17
    $region16: #{tpu_custom_call.1} parent=1 // pred_region
      %39 = dma.done [#allocation6], 4480
    $region17: #{tpu_custom_call.1} parent=1 // pred_fallthru
      _
    %v40 = vld [vmem:[#allocation2] sm:$0xff]
    %v41 = vld [vmem:[#allocation2 + $0x8] sm:$0xff]
    %v42 = vld [vmem:[#allocation2 + $0x10] sm:$0xff]
    %v43 = vld [vmem:[#allocation2 + $0x18] sm:$0xff]
    %v44 = vld [vmem:[#allocation5] sm:$0xff]
    %v45 = vld [vmem:[#allocation5 + $0x8] sm:$0xff]
    %v46 = vld [vmem:[#allocation5 + $0x10] sm:$0xff]
    %v47 = vld [vmem:[#allocation5 + $0x18] sm:$0xff]
    %v48 = vld [vmem:[#allocation5 + $0x20] sm:$0xff]
    %v49 = vld [vmem:[#allocation5 + $0x28] sm:$0xff]
    %v50 = vld [vmem:[#allocation5 + $0x30] sm:$0xff]
    %v51 = vld [vmem:[#allocation5 + $0x38] sm:$0xff]
    %v52 = vld [vmem:[#allocation5 + $0x40] sm:$0xff]
    %v53 = vld [vmem:[#allocation5 + $0x48] sm:$0xff]
    %v54 = vld [vmem:[#allocation5 + $0x50] sm:$0xff]
    %v55 = vld [vmem:[#allocation5 + $0x58] sm:$0xff]
    %v56 = vld [vmem:[#allocation5 + $0x60] sm:$0xff]
    %v57 = vld [vmem:[#allocation5 + $0x68] sm:$0xff]
    %v58 = vld [vmem:[#allocation5 + $0x70] sm:$0xff]
    %v59 = vld [vmem:[#allocation5 + $0x78] sm:$0xff]
    %v60 = vld [vmem:[#allocation5 + $0x80] sm:$0xff]
    %v61 = vld [vmem:[#allocation5 + $0x88] sm:$0xff]
    %v62 = vld [vmem:[#allocation5 + $0x90] sm:$0xff]
    %v63 = vld [vmem:[#allocation5 + $0x98] sm:$0xff]
    %v64 = vld [vmem:[#allocation5 + $0xa0] sm:$0xff]
    %v65 = vld [vmem:[#allocation5 + $0xa8] sm:$0xff]
    %v66 = vld [vmem:[#allocation5 + $0xb0] sm:$0xff]
    %v67 = vld [vmem:[#allocation5 + $0xb8] sm:$0xff]
    %v68 = vld [vmem:[#allocation5 + $0xc0] sm:$0xff]
    %v69 = vld [vmem:[#allocation5 + $0xc8] sm:$0xff]
    %v70 = vld [vmem:[#allocation5 + $0xd0] sm:$0xff]
    %v71 = vld [vmem:[#allocation5 + $0xd8] sm:$0xff]
    %v72 = vld [vmem:[#allocation5 + $0xe0] sm:$0xff]
    %v73 = vld [vmem:[#allocation5 + $0xe8] sm:$0xff]
    %v74 = vld [vmem:[#allocation5 + $0xf0] sm:$0xff]
    %v75 = vld [vmem:[#allocation5 + $0xf8] sm:$0xff]
    %v76 = vld [vmem:[#allocation5 + $0x110] sm:$0x1]
    %v77 = vld [vmem:[#allocation5 + $0x111] sm:$0x1]
    %v78 = vld [vmem:[#allocation5 + $0x112] sm:$0x1]
    %v79 = vlaneseq
    %v80 = vshrl.u32 %v79, 7
    %v81 = vsub.s32 0, %v80
    %v82 = vrot.slane %v76, %v81
    %83 = vmatprep.subr.mxu0 0.0
    %v84 = vand.u32 %v44, 4294901760
    %85 = vmatpush1.msra.mxu0 %v84
    %86 = vmatprep.subr.mxu0 0.0
    %v87 = vand.u32 %v45, 4294901760
    %88 = vmatpush1.msra.mxu0 %v87
    %89 = vmatprep.subr.mxu0 0.0
    %v90 = vand.u32 %v46, 4294901760
    %91 = vmatpush1.msra.mxu0 %v90
    %92 = vmatprep.subr.mxu0 0.0
    %v93 = vand.u32 %v47, 4294901760
    %94 = vmatpush1.msra.mxu0 %v93
    %95 = vmatprep.subr.mxu0 0.0
    %v96 = vand.u32 %v48, 4294901760
    %97 = vmatpush1.msra.mxu0 %v96
    %98 = vmatprep.subr.mxu0 0.0
    %v99 = vand.u32 %v49, 4294901760
    %100 = vmatpush1.msra.mxu0 %v99
    %101 = vmatprep.subr.mxu0 0.0
    %v102 = vand.u32 %v50, 4294901760
    %103 = vmatpush1.msra.mxu0 %v102
    %104 = vmatprep.subr.mxu0 0.0
    %v105 = vand.u32 %v51, 4294901760
    %106 = vmatpush1.msra.mxu0 %v105
    %107 = vmatprep.subr.mxu0 0.0
    %v108 = vand.u32 %v52, 4294901760
    %109 = vmatpush1.msra.mxu0 %v108
    %110 = vmatprep.subr.mxu0 0.0
    %v111 = vand.u32 %v53, 4294901760
    %112 = vmatpush1.msra.mxu0 %v111
    %113 = vmatprep.subr.mxu0 0.0
    %v114 = vand.u32 %v54, 4294901760
    %115 = vmatpush1.msra.mxu0 %v114
    %116 = vmatprep.subr.mxu0 0.0
    %v117 = vand.u32 %v55, 4294901760
    %118 = vmatpush1.msra.mxu0 %v117
    %119 = vmatprep.subr.mxu0 0.0
    %v120 = vand.u32 %v56, 4294901760
    %121 = vmatpush1.msra.mxu0 %v120
    %122 = vmatprep.subr.mxu0 0.0
    %v123 = vand.u32 %v57, 4294901760
    %124 = vmatpush1.msra.mxu0 %v123
    %125 = vmatprep.subr.mxu0 0.0
    %v126 = vand.u32 %v58, 4294901760
    %127 = vmatpush1.msra.mxu0 %v126
    %128 = vmatprep.subr.mxu0 0.0
    %v129 = vand.u32 %v59, 4294901760
    %130 = vmatpush1.msra.mxu0 %v129
    %131 = vmatprep.subr.mxu0 0.0
    %132 = vmatpush1.msra.mxu0 0.0
    %133 = vmatprep.subr.mxu0 0.0
    %134 = vmatpush1.msra.mxu0 0.0
    %135 = vmatprep.subr.mxu0 0.0
    %136 = vmatpush1.msra.mxu0 0.0
    %137 = vmatprep.subr.mxu0 0.0
    %138 = vmatpush1.msra.mxu0 0.0
    %139 = vmatprep.subr.mxu0 0.0
    %140 = vmatpush1.msra.mxu0 0.0
    %141 = vmatprep.subr.mxu0 0.0
    %142 = vmatpush1.msra.mxu0 0.0
    %143 = vmatprep.subr.mxu0 0.0
    %144 = vmatpush1.msra.mxu0 0.0
    %145 = vmatprep.subr.mxu0 0.0
    %146 = vmatpush1.msra.mxu0 0.0
    %147 = vmatprep.subr.mxu0 0.0
    %148 = vmatpush1.msra.mxu0 0.0
    %149 = vmatprep.subr.mxu0 0.0
    %150 = vmatpush1.msra.mxu0 0.0
    %151 = vmatprep.subr.mxu0 0.0
    %152 = vmatpush1.msra.mxu0 0.0
    %153 = vmatprep.subr.mxu0 0.0
    %154 = vmatpush1.msra.mxu0 0.0
    %155 = vmatprep.subr.mxu0 0.0
    %156 = vmatpush1.msra.mxu0 0.0
    %157 = vmatprep.subr.mxu0 0.0
    %158 = vmatpush1.msra.mxu0 0.0
    %159 = vmatprep.subr.mxu0 0.0
    %160 = vmatpush1.msra.mxu0 0.0
    %161 = vmatprep.subr.mxu0 0.0
    %162 = vmatpush1.msra.mxu0 0.0
    %163 = vmatprep.mubr.f32.mxu0 0.0
    %v164 = vand.u32 %v40, 4294901760
    %v165 = vsub.f32 %v40, %v164
    %v166 = vand.u32 %v165, 4294901760
    %v167 = vsub.f32 %v165, %v166
    %v168 = vand.u32 %v167, 4294901760
    %169 = vmatmul.mubr.f32.gmra.mrb[0].mxu0 %v168
    %v170 = vpop.f32.mrb[0].mxu0
    %v171 = vadd.f32 %v82, %v170
    %v172 = vpop.f32.mrb[0].mxu0
    %173 = vmatprep.mubr.f32.mxu0 0.0
    %v174 = vand.u32 %v41, 4294901760
    %v175 = vsub.f32 %v41, %v174
    %v176 = vand.u32 %v175, 4294901760
    %v177 = vsub.f32 %v175, %v176
    %v178 = vand.u32 %v177, 4294901760
    %179 = vmatmul.mubr.f32.gmra.mrb[0].mxu0 %v178
    %v180 = vpop.f32.mrb[0].mxu0
    %v181 = vadd.f32 %v82, %v180
    %v182 = vpop.f32.mrb[0].mxu0
    %183 = vmatprep.mubr.f32.mxu0 0.0
    %v184 = vand.u32 %v42, 4294901760
    %v185 = vsub.f32 %v42, %v184
    %v186 = vand.u32 %v185, 4294901760
    %v187 = vsub.f32 %v185, %v186
    %v188 = vand.u32 %v187, 4294901760
    %189 = vmatmul.mubr.f32.gmra.mrb[0].mxu0 %v188
    %v190 = vpop.f32.mrb[0].mxu0
    %v191 = vadd.f32 %v82, %v190
    %v192 = vpop.f32.mrb[0].mxu0
    %193 = vmatprep.mubr.f32.mxu0 0.0
    %v194 = vand.u32 %v43, 4294901760
    %v195 = vsub.f32 %v43, %v194
    %v196 = vand.u32 %v195, 4294901760
    %v197 = vsub.f32 %v195, %v196
    %v198 = vand.u32 %v197, 4294901760
    %199 = vmatmul.mubr.f32.gmra.mrb[0].mxu0 %v198
    %v200 = vpop.f32.mrb[0].mxu0
    %v201 = vadd.f32 %v82, %v200
    %v202 = vpop.f32.mrb[0].mxu0
    %203 = vdwg.mxu0
    %204 = vmatprep.subr.mxu0 0.0
    %v205 = vand.u32 %v44, 4294901760
    %v206 = vsub.f32 %v44, %v205
    %v207 = vand.u32 %v206, 4294901760
    %v208 = vsub.f32 %v206, %v207
    %v209 = vand.u32 %v208, 4294901760
    %210 = vmatpush1.msra.mxu0 %v209
    %211 = vmatprep.subr.mxu0 0.0
    %v212 = vand.u32 %v45, 4294901760
    %v213 = vsub.f32 %v45, %v212
    %v214 = vand.u32 %v213, 4294901760
    %v215 = vsub.f32 %v213, %v214
    %v216 = vand.u32 %v215, 4294901760
    %217 = vmatpush1.msra.mxu0 %v216
    %218 = vmatprep.subr.mxu0 0.0
    %v219 = vand.u32 %v46, 4294901760
    %v220 = vsub.f32 %v46, %v219
    %v221 = vand.u32 %v220, 4294901760
    %v222 = vsub.f32 %v220, %v221
    %v223 = vand.u32 %v222, 4294901760
    %224 = vmatpush1.msra.mxu0 %v223
    %225 = vmatprep.subr.mxu0 0.0
    %v226 = vand.u32 %v47, 4294901760
    %v227 = vsub.f32 %v47, %v226
    %v228 = vand.u32 %v227, 4294901760
    %v229 = vsub.f32 %v227, %v228
    %v230 = vand.u32 %v229, 4294901760
    %231 = vmatpush1.msra.mxu0 %v230
    %232 = vmatprep.subr.mxu0 0.0
    %v233 = vand.u32 %v48, 4294901760
    %v234 = vsub.f32 %v48, %v233
    %v235 = vand.u32 %v234, 4294901760
    %v236 = vsub.f32 %v234, %v235
    %v237 = vand.u32 %v236, 4294901760
    %238 = vmatpush1.msra.mxu0 %v237
    %239 = vmatprep.subr.mxu0 0.0
    %v240 = vand.u32 %v49, 4294901760
    %v241 = vsub.f32 %v49, %v240
    %v242 = vand.u32 %v241, 4294901760
    %v243 = vsub.f32 %v241, %v242
    %v244 = vand.u32 %v243, 4294901760
    %245 = vmatpush1.msra.mxu0 %v244
    %246 = vmatprep.subr.mxu0 0.0
    %v247 = vand.u32 %v50, 4294901760
    %v248 = vsub.f32 %v50, %v247
    %v249 = vand.u32 %v248, 4294901760
    %v250 = vsub.f32 %v248, %v249
    %v251 = vand.u32 %v250, 4294901760
    %252 = vmatpush1.msra.mxu0 %v251
    %253 = vmatprep.subr.mxu0 0.0
    %v254 = vand.u32 %v51, 4294901760
    %v255 = vsub.f32 %v51, %v254
    %v256 = vand.u32 %v255, 4294901760
    %v257 = vsub.f32 %v255, %v256
    %v258 = vand.u32 %v257, 4294901760
    %259 = vmatpush1.msra.mxu0 %v258
    %260 = vmatprep.subr.mxu0 0.0
    %v261 = vand.u32 %v52, 4294901760
    %v262 = vsub.f32 %v52, %v261
    %v263 = vand.u32 %v262, 4294901760
    %v264 = vsub.f32 %v262, %v263
    %v265 = vand.u32 %v264, 4294901760
    %266 = vmatpush1.msra.mxu0 %v265
    %267 = vmatprep.subr.mxu0 0.0
    %v268 = vand.u32 %v53, 4294901760
    %v269 = vsub.f32 %v53, %v268
    %v270 = vand.u32 %v269, 4294901760
    %v271 = vsub.f32 %v269, %v270
    %v272 = vand.u32 %v271, 4294901760
    %273 = vmatpush1.msra.mxu0 %v272
    %274 = vmatprep.subr.mxu0 0.0
    %v275 = vand.u32 %v54, 4294901760
    %v276 = vsub.f32 %v54, %v275
    %v277 = vand.u32 %v276, 4294901760
    %v278 = vsub.f32 %v276, %v277
    %v279 = vand.u32 %v278, 4294901760
    %280 = vmatpush1.msra.mxu0 %v279
    %281 = vmatprep.subr.mxu0 0.0
    %v282 = vand.u32 %v55, 4294901760
    %v283 = vsub.f32 %v55, %v282
    %v284 = vand.u32 %v283, 4294901760
    %v285 = vsub.f32 %v283, %v284
    %v286 = vand.u32 %v285, 4294901760
    %287 = vmatpush1.msra.mxu0 %v286
    %288 = vmatprep.subr.mxu0 0.0
    %v289 = vand.u32 %v56, 4294901760
    %v290 = vsub.f32 %v56, %v289
    %v291 = vand.u32 %v290, 4294901760
    %v292 = vsub.f32 %v290, %v291
    %v293 = vand.u32 %v292, 4294901760
    %294 = vmatpush1.msra.mxu0 %v293
    %295 = vmatprep.subr.mxu0 0.0
    %v296 = vand.u32 %v57, 4294901760
    %v297 = vsub.f32 %v57, %v296
    %v298 = vand.u32 %v297, 4294901760
    %v299 = vsub.f32 %v297, %v298
    %v300 = vand.u32 %v299, 4294901760
    %301 = vmatpush1.msra.mxu0 %v300
    %302 = vmatprep.subr.mxu0 0.0
    %v303 = vand.u32 %v58, 4294901760
    %v304 = vsub.f32 %v58, %v303
    %v305 = vand.u32 %v304, 4294901760
    %v306 = vsub.f32 %v304, %v305
    %v307 = vand.u32 %v306, 4294901760
    %308 = vmatpush1.msra.mxu0 %v307
    %309 = vmatprep.subr.mxu0 0.0
    %v310 = vand.u32 %v59, 4294901760
    %v311 = vsub.f32 %v59, %v310
    %v312 = vand.u32 %v311, 4294901760
    %v313 = vsub.f32 %v311, %v312
    %v314 = vand.u32 %v313, 4294901760
    %315 = vmatpush1.msra.mxu0 %v314
    %316 = vmatprep.subr.mxu0 0.0
    %317 = vmatpush1.msra.mxu0 0.0
    %318 = vmatprep.subr.mxu0 0.0
    %319 = vmatpush1.msra.mxu0 0.0
    %320 = vmatprep.subr.mxu0 0.0
    %321 = vmatpush1.msra.mxu0 0.0
    %322 = vmatprep.subr.mxu0 0.0
    %323 = vmatpush1.msra.mxu0 0.0
    %324 = vmatprep.subr.mxu0 0.0
    %325 = vmatpush1.msra.mxu0 0.0
    %326 = vmatprep.subr.mxu0 0.0
    %327 = vmatpush1.msra.mxu0 0.0
    %328 = vmatprep.subr.mxu0 0.0
    %329 = vmatpush1.msra.mxu0 0.0
    %330 = vmatprep.subr.mxu0 0.0
    %331 = vmatpush1.msra.mxu0 0.0
    %332 = vmatprep.subr.mxu0 0.0
    %333 = vmatpush1.msra.mxu0 0.0
    %334 = vmatprep.subr.mxu0 0.0
    %335 = vmatpush1.msra.mxu0 0.0
    %336 = vmatprep.subr.mxu0 0.0
    %337 = vmatpush1.msra.mxu0 0.0
    %338 = vmatprep.subr.mxu0 0.0
    %339 = vmatpush1.msra.mxu0 0.0
    %340 = vmatprep.subr.mxu0 0.0
    %341 = vmatpush1.msra.mxu0 0.0
    %342 = vmatprep.subr.mxu0 0.0
    %343 = vmatpush1.msra.mxu0 0.0
    %344 = vmatprep.subr.mxu0 0.0
    %345 = vmatpush1.msra.mxu0 0.0
    %346 = vmatprep.subr.mxu0 0.0
    %347 = vmatpush1.msra.mxu0 0.0
    %348 = vmatprep.mubr.f32.mxu0 0.0
    %v349 = vand.u32 %v40, 4294901760
    %350 = vmatmul.mubr.f32.gmra.mrb[0].mxu0 %v349
    %v351 = vpop.f32.mrb[0].mxu0
    %v352 = vadd.f32 %v171, %v351
    %v353 = vpop.f32.mrb[0].mxu0
    %354 = vmatprep.mubr.f32.mxu0 0.0
    %v355 = vand.u32 %v41, 4294901760
    %356 = vmatmul.mubr.f32.gmra.mrb[0].mxu0 %v355
    %v357 = vpop.f32.mrb[0].mxu0
    %v358 = vadd.f32 %v181, %v357
    %v359 = vpop.f32.mrb[0].mxu0
    %360 = vmatprep.mubr.f32.mxu0 0.0
    %v361 = vand.u32 %v42, 4294901760
    %362 = vmatmul.mubr.f32.gmra.mrb[0].mxu0 %v361
    %v363 = vpop.f32.mrb[0].mxu0
    %v364 = vadd.f32 %v191, %v363
    %v365 = vpop.f32.mrb[0].mxu0
    %366 = vmatprep.mubr.f32.mxu0 0.0
    %v367 = vand.u32 %v43, 4294901760
    %368 = vmatmul.mubr.f32.gmra.mrb[0].mxu0 %v367
    %v369 = vpop.f32.mrb[0].mxu0
    %v370 = vadd.f32 %v201, %v369
    %v371 = vpop.f32.mrb[0].mxu0
    %372 = vdwg.mxu0
    %373 = vmatprep.subr.mxu0 0.0
    %v374 = vand.u32 %v44, 4294901760
    %v375 = vsub.f32 %v44, %v374
    %376 = vmatpush1.msra.mxu0 %v375
    %377 = vmatprep.subr.mxu0 0.0
    %v378 = vand.u32 %v45, 4294901760
    %v379 = vsub.f32 %v45, %v378
    %380 = vmatpush1.msra.mxu0 %v379
    %381 = vmatprep.subr.mxu0 0.0
    %v382 = vand.u32 %v46, 4294901760
    %v383 = vsub.f32 %v46, %v382
    %384 = vmatpush1.msra.mxu0 %v383
    %385 = vmatprep.subr.mxu0 0.0
    %v386 = vand.u32 %v47, 4294901760
    %v387 = vsub.f32 %v47, %v386
    %388 = vmatpush1.msra.mxu0 %v387
    %389 = vmatprep.subr.mxu0 0.0
    %v390 = vand.u32 %v48, 4294901760
    %v391 = vsub.f32 %v48, %v390
    %392 = vmatpush1.msra.mxu0 %v391
    %393 = vmatprep.subr.mxu0 0.0
    %v394 = vand.u32 %v49, 4294901760
    %v395 = vsub.f32 %v49, %v394
    %396 = vmatpush1.msra.mxu0 %v395
    %397 = vmatprep.subr.mxu0 0.0
    %v398 = vand.u32 %v50, 4294901760
    %v399 = vsub.f32 %v50, %v398
    %400 = vmatpush1.msra.mxu0 %v399
    %401 = vmatprep.subr.mxu0 0.0
    %v402 = vand.u32 %v51, 4294901760
    %v403 = vsub.f32 %v51, %v402
    %404 = vmatpush1.msra.mxu0 %v403
    %405 = vmatprep.subr.mxu0 0.0
    %v406 = vand.u32 %v52, 4294901760
    %v407 = vsub.f32 %v52, %v406
    %408 = vmatpush1.msra.mxu0 %v407
    %409 = vmatprep.subr.mxu0 0.0
    %v410 = vand.u32 %v53, 4294901760
    %v411 = vsub.f32 %v53, %v410
    %412 = vmatpush1.msra.mxu0 %v411
    %413 = vmatprep.subr.mxu0 0.0
    %v414 = vand.u32 %v54, 4294901760
    %v415 = vsub.f32 %v54, %v414
    %416 = vmatpush1.msra.mxu0 %v415
    %417 = vmatprep.subr.mxu0 0.0
    %v418 = vand.u32 %v55, 4294901760
    %v419 = vsub.f32 %v55, %v418
    %420 = vmatpush1.msra.mxu0 %v419
    %421 = vmatprep.subr.mxu0 0.0
    %v422 = vand.u32 %v56, 4294901760
    %v423 = vsub.f32 %v56, %v422
    %424 = vmatpush1.msra.mxu0 %v423
    %425 = vmatprep.subr.mxu0 0.0
    %v426 = vand.u32 %v57, 4294901760
    %v427 = vsub.f32 %v57, %v426
    %428 = vmatpush1.msra.mxu0 %v427
    %429 = vmatprep.subr.mxu0 0.0
    %v430 = vand.u32 %v58, 4294901760
    %v431 = vsub.f32 %v58, %v430
    %432 = vmatpush1.msra.mxu0 %v431
    %433 = vmatprep.subr.mxu0 0.0
    %v434 = vand.u32 %v59, 4294901760
    %v435 = vsub.f32 %v59, %v434
    %436 = vmatpush1.msra.mxu0 %v435
    %437 = vmatprep.subr.mxu0 0.0
    %438 = vmatpush1.msra.mxu0 0.0
    %439 = vmatprep.subr.mxu0 0.0
    %440 = vmatpush1.msra.mxu0 0.0
    %441 = vmatprep.subr.mxu0 0.0
    %442 = vmatpush1.msra.mxu0 0.0
    %443 = vmatprep.subr.mxu0 0.0
    %444 = vmatpush1.msra.mxu0 0.0
    %445 = vmatprep.subr.mxu0 0.0
    %446 = vmatpush1.msra.mxu0 0.0
    %447 = vmatprep.subr.mxu0 0.0
    %448 = vmatpush1.msra.mxu0 0.0
    %449 = vmatprep.subr.mxu0 0.0
    %450 = vmatpush1.msra.mxu0 0.0
    %451 = vmatprep.subr.mxu0 0.0
    %452 = vmatpush1.msra.mxu0 0.0
    %453 = vmatprep.subr.mxu0 0.0
    %454 = vmatpush1.msra.mxu0 0.0
    %455 = vmatprep.subr.mxu0 0.0
    %456 = vmatpush1.msra.mxu0 0.0
    %457 = vmatprep.subr.mxu0 0.0
    %458 = vmatpush1.msra.mxu0 0.0
    %459 = vmatprep.subr.mxu0 0.0
    %460 = vmatpush1.msra.mxu0 0.0
    %461 = vmatprep.subr.mxu0 0.0
    %462 = vmatpush1.msra.mxu0 0.0
    %463 = vmatprep.subr.mxu0 0.0
    %464 = vmatpush1.msra.mxu0 0.0
    %465 = vmatprep.subr.mxu0 0.0
    %466 = vmatpush1.msra.mxu0 0.0
    %467 = vmatprep.subr.mxu0 0.0
    %468 = vmatpush1.msra.mxu0 0.0
    %469 = vmatprep.mubr.f32.mxu0 0.0
    %v470 = vand.u32 %v40, 4294901760
    %v471 = vsub.f32 %v40, %v470
    %472 = vmatmul.mubr.f32.gmra.mrb[0].mxu0 %v471
    %v473 = vpop.f32.mrb[0].mxu0
    %v474 = vadd.f32 %v352, %v473
    %v475 = vpop.f32.mrb[0].mxu0
    %476 = vmatprep.mubr.f32.mxu0 0.0
    %v477 = vand.u32 %v41, 4294901760
    %v478 = vsub.f32 %v41, %v477
    %479 = vmatmul.mubr.f32.gmra.mrb[0].mxu0 %v478
    %v480 = vpop.f32.mrb[0].mxu0
    %v481 = vadd.f32 %v358, %v480
    %v482 = vpop.f32.mrb[0].mxu0
    %483 = vmatprep.mubr.f32.mxu0 0.0
    %v484 = vand.u32 %v42, 4294901760
    %v485 = vsub.f32 %v42, %v484
    %486 = vmatmul.mubr.f32.gmra.mrb[0].mxu0 %v485
    %v487 = vpop.f32.mrb[0].mxu0
    %v488 = vadd.f32 %v364, %v487
    %v489 = vpop.f32.mrb[0].mxu0
    %490 = vmatprep.mubr.f32.mxu0 0.0
    %v491 = vand.u32 %v43, 4294901760
    %v492 = vsub.f32 %v43, %v491
    %493 = vmatmul.mubr.f32.gmra.mrb[0].mxu0 %v492
    %v494 = vpop.f32.mrb[0].mxu0
    %v495 = vadd.f32 %v370, %v494
    %v496 = vpop.f32.mrb[0].mxu0
    %497 = vdwg.mxu0
    %498 = vmatprep.subr.mxu0 0.0
    %v499 = vand.u32 %v44, 4294901760
    %500 = vmatpush1.msra.mxu0 %v499
    %501 = vmatprep.subr.mxu0 0.0
    %v502 = vand.u32 %v45, 4294901760
    %503 = vmatpush1.msra.mxu0 %v502
    %504 = vmatprep.subr.mxu0 0.0
    %v505 = vand.u32 %v46, 4294901760
    %506 = vmatpush1.msra.mxu0 %v505
    %507 = vmatprep.subr.mxu0 0.0
    %v508 = vand.u32 %v47, 4294901760
    %509 = vmatpush1.msra.mxu0 %v508
    %510 = vmatprep.subr.mxu0 0.0
    %v511 = vand.u32 %v48, 4294901760
    %512 = vmatpush1.msra.mxu0 %v511
    %513 = vmatprep.subr.mxu0 0.0
    %v514 = vand.u32 %v49, 4294901760
    %515 = vmatpush1.msra.mxu0 %v514
    %516 = vmatprep.subr.mxu0 0.0
    %v517 = vand.u32 %v50, 4294901760
    %518 = vmatpush1.msra.mxu0 %v517
    %519 = vmatprep.subr.mxu0 0.0
    %v520 = vand.u32 %v51, 4294901760
    %521 = vmatpush1.msra.mxu0 %v520
    %522 = vmatprep.subr.mxu0 0.0
    %v523 = vand.u32 %v52, 4294901760
    %524 = vmatpush1.msra.mxu0 %v523
    %525 = vmatprep.subr.mxu0 0.0
    %v526 = vand.u32 %v53, 4294901760
    %527 = vmatpush1.msra.mxu0 %v526
    %528 = vmatprep.subr.mxu0 0.0
    %v529 = vand.u32 %v54, 4294901760
    %530 = vmatpush1.msra.mxu0 %v529
    %531 = vmatprep.subr.mxu0 0.0
    %v532 = vand.u32 %v55, 4294901760
    %533 = vmatpush1.msra.mxu0 %v532
    %534 = vmatprep.subr.mxu0 0.0
    %v535 = vand.u32 %v56, 4294901760
    %536 = vmatpush1.msra.mxu0 %v535
    %537 = vmatprep.subr.mxu0 0.0
    %v538 = vand.u32 %v57, 4294901760
    %539 = vmatpush1.msra.mxu0 %v538
    %540 = vmatprep.subr.mxu0 0.0
    %v541 = vand.u32 %v58, 4294901760
    %542 = vmatpush1.msra.mxu0 %v541
    %543 = vmatprep.subr.mxu0 0.0
    %v544 = vand.u32 %v59, 4294901760
    %545 = vmatpush1.msra.mxu0 %v544
    %546 = vmatprep.subr.mxu0 0.0
    %547 = vmatpush1.msra.mxu0 0.0
    %548 = vmatprep.subr.mxu0 0.0
    %549 = vmatpush1.msra.mxu0 0.0
    %550 = vmatprep.subr.mxu0 0.0
    %551 = vmatpush1.msra.mxu0 0.0
    %552 = vmatprep.subr.mxu0 0.0
    %553 = vmatpush1.msra.mxu0 0.0
    %554 = vmatprep.subr.mxu0 0.0
    %555 = vmatpush1.msra.mxu0 0.0
    %556 = vmatprep.subr.mxu0 0.0
    %557 = vmatpush1.msra.mxu0 0.0
    %558 = vmatprep.subr.mxu0 0.0
    %559 = vmatpush1.msra.mxu0 0.0
    %560 = vmatprep.subr.mxu0 0.0
    %561 = vmatpush1.msra.mxu0 0.0
    %562 = vmatprep.subr.mxu0 0.0
    %563 = vmatpush1.msra.mxu0 0.0
    %564 = vmatprep.subr.mxu0 0.0
    %565 = vmatpush1.msra.mxu0 0.0
    %566 = vmatprep.subr.mxu0 0.0
    %567 = vmatpush1.msra.mxu0 0.0
    %568 = vmatprep.subr.mxu0 0.0
    %569 = vmatpush1.msra.mxu0 0.0
    %570 = vmatprep.subr.mxu0 0.0
    %571 = vmatpush1.msra.mxu0 0.0
    %572 = vmatprep.subr.mxu0 0.0
    %573 = vmatpush1.msra.mxu0 0.0
    %574 = vmatprep.subr.mxu0 0.0
    %575 = vmatpush1.msra.mxu0 0.0
    %576 = vmatprep.subr.mxu0 0.0
    %577 = vmatpush1.msra.mxu0 0.0
    %578 = vmatprep.mubr.f32.mxu0 0.0
    %v579 = vand.u32 %v40, 4294901760
    %v580 = vsub.f32 %v40, %v579
    %v581 = vand.u32 %v580, 4294901760
    %582 = vmatmul.mubr.f32.gmra.mrb[0].mxu0 %v581
    %v583 = vpop.f32.mrb[0].mxu0
    %v584 = vadd.f32 %v474, %v583
    %v585 = vpop.f32.mrb[0].mxu0
    %586 = vmatprep.mubr.f32.mxu0 0.0
    %v587 = vand.u32 %v41, 4294901760
    %v588 = vsub.f32 %v41, %v587
    %v589 = vand.u32 %v588, 4294901760
    %590 = vmatmul.mubr.f32.gmra.mrb[0].mxu0 %v589
    %v591 = vpop.f32.mrb[0].mxu0
    %v592 = vadd.f32 %v481, %v591
    %v593 = vpop.f32.mrb[0].mxu0
    %594 = vmatprep.mubr.f32.mxu0 0.0
    %v595 = vand.u32 %v42, 4294901760
    %v596 = vsub.f32 %v42, %v595
    %v597 = vand.u32 %v596, 4294901760
    %598 = vmatmul.mubr.f32.gmra.mrb[0].mxu0 %v597
    %v599 = vpop.f32.mrb[0].mxu0
    %v600 = vadd.f32 %v488, %v599
    %v601 = vpop.f32.mrb[0].mxu0
    %602 = vmatprep.mubr.f32.mxu0 0.0
    %v603 = vand.u32 %v43, 4294901760
    %v604 = vsub.f32 %v43, %v603
    %v605 = vand.u32 %v604, 4294901760
    %606 = vmatmul.mubr.f32.gmra.mrb[0].mxu0 %v605
    %v607 = vpop.f32.mrb[0].mxu0
    %v608 = vadd.f32 %v495, %v607
    %v609 = vpop.f32.mrb[0].mxu0
    %610 = vdwg.mxu0
    %611 = vmatprep.subr.mxu0 0.0
    %v612 = vand.u32 %v44, 4294901760
    %v613 = vsub.f32 %v44, %v612
    %v614 = vand.u32 %v613, 4294901760
    %615 = vmatpush1.msra.mxu0 %v614
    %616 = vmatprep.subr.mxu0 0.0
    %v617 = vand.u32 %v45, 4294901760
    %v618 = vsub.f32 %v45, %v617
    %v619 = vand.u32 %v618, 4294901760
    %620 = vmatpush1.msra.mxu0 %v619
    %621 = vmatprep.subr.mxu0 0.0
    %v622 = vand.u32 %v46, 4294901760
    %v623 = vsub.f32 %v46, %v622
    %v624 = vand.u32 %v623, 4294901760
    %625 = vmatpush1.msra.mxu0 %v624
    %626 = vmatprep.subr.mxu0 0.0
    %v627 = vand.u32 %v47, 4294901760
    %v628 = vsub.f32 %v47, %v627
    %v629 = vand.u32 %v628, 4294901760
    %630 = vmatpush1.msra.mxu0 %v629
    %631 = vmatprep.subr.mxu0 0.0
    %v632 = vand.u32 %v48, 4294901760
    %v633 = vsub.f32 %v48, %v632
    %v634 = vand.u32 %v633, 4294901760
    %635 = vmatpush1.msra.mxu0 %v634
    %636 = vmatprep.subr.mxu0 0.0
    %v637 = vand.u32 %v49, 4294901760
    %v638 = vsub.f32 %v49, %v637
    %v639 = vand.u32 %v638, 4294901760
    %640 = vmatpush1.msra.mxu0 %v639
    %641 = vmatprep.subr.mxu0 0.0
    %v642 = vand.u32 %v50, 4294901760
    %v643 = vsub.f32 %v50, %v642
    %v644 = vand.u32 %v643, 4294901760
    %645 = vmatpush1.msra.mxu0 %v644
    %646 = vmatprep.subr.mxu0 0.0
    %v647 = vand.u32 %v51, 4294901760
    %v648 = vsub.f32 %v51, %v647
    %v649 = vand.u32 %v648, 4294901760
    %650 = vmatpush1.msra.mxu0 %v649
    %651 = vmatprep.subr.mxu0 0.0
    %v652 = vand.u32 %v52, 4294901760
    %v653 = vsub.f32 %v52, %v652
    %v654 = vand.u32 %v653, 4294901760
    %655 = vmatpush1.msra.mxu0 %v654
    %656 = vmatprep.subr.mxu0 0.0
    %v657 = vand.u32 %v53, 4294901760
    %v658 = vsub.f32 %v53, %v657
    %v659 = vand.u32 %v658, 4294901760
    %660 = vmatpush1.msra.mxu0 %v659
    %661 = vmatprep.subr.mxu0 0.0
    %v662 = vand.u32 %v54, 4294901760
    %v663 = vsub.f32 %v54, %v662
    %v664 = vand.u32 %v663, 4294901760
    %665 = vmatpush1.msra.mxu0 %v664
    %666 = vmatprep.subr.mxu0 0.0
    %v667 = vand.u32 %v55, 4294901760
    %v668 = vsub.f32 %v55, %v667
    %v669 = vand.u32 %v668, 4294901760
    %670 = vmatpush1.msra.mxu0 %v669
    %671 = vmatprep.subr.mxu0 0.0
    %v672 = vand.u32 %v56, 4294901760
    %v673 = vsub.f32 %v56, %v672
    %v674 = vand.u32 %v673, 4294901760
    %675 = vmatpush1.msra.mxu0 %v674
    %676 = vmatprep.subr.mxu0 0.0
    %v677 = vand.u32 %v57, 4294901760
    %v678 = vsub.f32 %v57, %v677
    %v679 = vand.u32 %v678, 4294901760
    %680 = vmatpush1.msra.mxu0 %v679
    %681 = vmatprep.subr.mxu0 0.0
    %v682 = vand.u32 %v58, 4294901760
    %v683 = vsub.f32 %v58, %v682
    %v684 = vand.u32 %v683, 4294901760
    %685 = vmatpush1.msra.mxu0 %v684
    %686 = vmatprep.subr.mxu0 0.0
    %v687 = vand.u32 %v59, 4294901760
    %v688 = vsub.f32 %v59, %v687
    %v689 = vand.u32 %v688, 4294901760
    %690 = vmatpush1.msra.mxu0 %v689
    %691 = vmatprep.subr.mxu0 0.0
    %692 = vmatpush1.msra.mxu0 0.0
    %693 = vmatprep.subr.mxu0 0.0
    %694 = vmatpush1.msra.mxu0 0.0
    %695 = vmatprep.subr.mxu0 0.0
    %696 = vmatpush1.msra.mxu0 0.0
    %697 = vmatprep.subr.mxu0 0.0
    %698 = vmatpush1.msra.mxu0 0.0
    %699 = vmatprep.subr.mxu0 0.0
    %700 = vmatpush1.msra.mxu0 0.0
    %701 = vmatprep.subr.mxu0 0.0
    %702 = vmatpush1.msra.mxu0 0.0
    %703 = vmatprep.subr.mxu0 0.0
    %704 = vmatpush1.msra.mxu0 0.0
    %705 = vmatprep.subr.mxu0 0.0
    %706 = vmatpush1.msra.mxu0 0.0
    %707 = vmatprep.subr.mxu0 0.0
    %708 = vmatpush1.msra.mxu0 0.0
    %709 = vmatprep.subr.mxu0 0.0
    %710 = vmatpush1.msra.mxu0 0.0
    %711 = vmatprep.subr.mxu0 0.0
    %712 = vmatpush1.msra.mxu0 0.0
    %713 = vmatprep.subr.mxu0 0.0
    %714 = vmatpush1.msra.mxu0 0.0
    %715 = vmatprep.subr.mxu0 0.0
    %716 = vmatpush1.msra.mxu0 0.0
    %717 = vmatprep.subr.mxu0 0.0
    %718 = vmatpush1.msra.mxu0 0.0
    %719 = vmatprep.subr.mxu0 0.0
    %720 = vmatpush1.msra.mxu0 0.0
    %721 = vmatprep.subr.mxu0 0.0
    %722 = vmatpush1.msra.mxu0 0.0
    %723 = vmatprep.mubr.f32.mxu0 0.0
    %v724 = vand.u32 %v40, 4294901760
    %725 = vmatmul.mubr.f32.gmra.mrb[0].mxu0 %v724
    %v726 = vpop.f32.mrb[0].mxu0
    %v727 = vadd.f32 %v584, %v726
    %v728 = vpop.f32.mrb[0].mxu0
    %729 = vmatprep.mubr.f32.mxu0 0.0
    %v730 = vand.u32 %v41, 4294901760
    %731 = vmatmul.mubr.f32.gmra.mrb[0].mxu0 %v730
    %v732 = vpop.f32.mrb[0].mxu0
    %v733 = vadd.f32 %v592, %v732
    %v734 = vpop.f32.mrb[0].mxu0
    %735 = vmatprep.mubr.f32.mxu0 0.0
    %v736 = vand.u32 %v42, 4294901760
    %737 = vmatmul.mubr.f32.gmra.mrb[0].mxu0 %v736
    %v738 = vpop.f32.mrb[0].mxu0
    %v739 = vadd.f32 %v600, %v738
    %v740 = vpop.f32.mrb[0].mxu0
    %741 = vmatprep.mubr.f32.mxu0 0.0
    %v742 = vand.u32 %v43, 4294901760
    %743 = vmatmul.mubr.f32.gmra.mrb[0].mxu0 %v742
    %v744 = vpop.f32.mrb[0].mxu0
    %v745 = vadd.f32 %v608, %v744
    %v746 = vpop.f32.mrb[0].mxu0
    %747 = vdwg.mxu0
    %748 = vmatprep.subr.mxu0 0.0
    %v749 = vand.u32 %v44, 4294901760
    %750 = vmatpush1.msra.mxu0 %v749
    %751 = vmatprep.subr.mxu0 0.0
    %v752 = vand.u32 %v45, 4294901760
    %753 = vmatpush1.msra.mxu0 %v752
    %754 = vmatprep.subr.mxu0 0.0
    %v755 = vand.u32 %v46, 4294901760
    %756 = vmatpush1.msra.mxu0 %v755
    %757 = vmatprep.subr.mxu0 0.0
    %v758 = vand.u32 %v47, 4294901760
    %759 = vmatpush1.msra.mxu0 %v758
    %760 = vmatprep.subr.mxu0 0.0
    %v761 = vand.u32 %v48, 4294901760
    %762 = vmatpush1.msra.mxu0 %v761
    %763 = vmatprep.subr.mxu0 0.0
    %v764 = vand.u32 %v49, 4294901760
    %765 = vmatpush1.msra.mxu0 %v764
    %766 = vmatprep.subr.mxu0 0.0
    %v767 = vand.u32 %v50, 4294901760
    %768 = vmatpush1.msra.mxu0 %v767
    %769 = vmatprep.subr.mxu0 0.0
    %v770 = vand.u32 %v51, 4294901760
    %771 = vmatpush1.msra.mxu0 %v770
    %772 = vmatprep.subr.mxu0 0.0
    %v773 = vand.u32 %v52, 4294901760
    %774 = vmatpush1.msra.mxu0 %v773
    %775 = vmatprep.subr.mxu0 0.0
    %v776 = vand.u32 %v53, 4294901760
    %777 = vmatpush1.msra.mxu0 %v776
    %778 = vmatprep.subr.mxu0 0.0
    %v779 = vand.u32 %v54, 4294901760
    %780 = vmatpush1.msra.mxu0 %v779
    %781 = vmatprep.subr.mxu0 0.0
    %v782 = vand.u32 %v55, 4294901760
    %783 = vmatpush1.msra.mxu0 %v782
    %784 = vmatprep.subr.mxu0 0.0
    %v785 = vand.u32 %v56, 4294901760
    %786 = vmatpush1.msra.mxu0 %v785
    %787 = vmatprep.subr.mxu0 0.0
    %v788 = vand.u32 %v57, 4294901760
    %789 = vmatpush1.msra.mxu0 %v788
    %790 = vmatprep.subr.mxu0 0.0
    %v791 = vand.u32 %v58, 4294901760
    %792 = vmatpush1.msra.mxu0 %v791
    %793 = vmatprep.subr.mxu0 0.0
    %v794 = vand.u32 %v59, 4294901760
    %795 = vmatpush1.msra.mxu0 %v794
    %796 = vmatprep.subr.mxu0 0.0
    %797 = vmatpush1.msra.mxu0 0.0
    %798 = vmatprep.subr.mxu0 0.0
    %799 = vmatpush1.msra.mxu0 0.0
    %800 = vmatprep.subr.mxu0 0.0
    %801 = vmatpush1.msra.mxu0 0.0
    %802 = vmatprep.subr.mxu0 0.0
    %803 = vmatpush1.msra.mxu0 0.0
    %804 = vmatprep.subr.mxu0 0.0
    %805 = vmatpush1.msra.mxu0 0.0
    %806 = vmatprep.subr.mxu0 0.0
    %807 = vmatpush1.msra.mxu0 0.0
    %808 = vmatprep.subr.mxu0 0.0
    %809 = vmatpush1.msra.mxu0 0.0
    %810 = vmatprep.subr.mxu0 0.0
    %811 = vmatpush1.msra.mxu0 0.0
    %812 = vmatprep.subr.mxu0 0.0
    %813 = vmatpush1.msra.mxu0 0.0
    %814 = vmatprep.subr.mxu0 0.0
    %815 = vmatpush1.msra.mxu0 0.0
    %816 = vmatprep.subr.mxu0 0.0
    %817 = vmatpush1.msra.mxu0 0.0
    %818 = vmatprep.subr.mxu0 0.0
    %819 = vmatpush1.msra.mxu0 0.0
    %820 = vmatprep.subr.mxu0 0.0
    %821 = vmatpush1.msra.mxu0 0.0
    %822 = vmatprep.subr.mxu0 0.0
    %823 = vmatpush1.msra.mxu0 0.0
    %824 = vmatprep.subr.mxu0 0.0
    %825 = vmatpush1.msra.mxu0 0.0
    %826 = vmatprep.subr.mxu0 0.0
    %827 = vmatpush1.msra.mxu0 0.0
    %828 = vmatprep.mubr.f32.mxu0 0.0
    %v829 = vand.u32 %v40, 4294901760
    %830 = vmatmul.mubr.f32.gmra.mrb[0].mxu0 %v829
    %v831 = vpop.f32.mrb[0].mxu0
    %v832 = vadd.f32 %v727, %v831
    %v833 = vpop.f32.mrb[0].mxu0
    %834 = vmatprep.mubr.f32.mxu0 0.0
    %v835 = vand.u32 %v41, 4294901760
    %836 = vmatmul.mubr.f32.gmra.mrb[0].mxu0 %v835
    %v837 = vpop.f32.mrb[0].mxu0
    %v838 = vadd.f32 %v733, %v837
    %v839 = vpop.f32.mrb[0].mxu0
    %840 = vmatprep.mubr.f32.mxu0 0.0
    %v841 = vand.u32 %v42, 4294901760
    %842 = vmatmul.mubr.f32.gmra.mrb[0].mxu0 %v841
    %v843 = vpop.f32.mrb[0].mxu0
    %v844 = vadd.f32 %v739, %v843
    %v845 = vpop.f32.mrb[0].mxu0
    %846 = vmatprep.mubr.f32.mxu0 0.0
    %v847 = vand.u32 %v43, 4294901760
    %848 = vmatmul.mubr.f32.gmra.mrb[0].mxu0 %v847
    %v849 = vpop.f32.mrb[0].mxu0
    %v850 = vadd.f32 %v745, %v849
    %v851 = vpop.f32.mrb[0].mxu0
    %852 = vdwg.mxu0
    %v853 = vmax.f32 %v832, 0.0
    %v854 = vmax.f32 %v838, 0.0
    %v855 = vmax.f32 %v844, 0.0
    %v856 = vmax.f32 %v850, 0.0
    %857 = vrot.lane.b32.xlu0 %v853, 8
    %v858 = vpop.permute.xlu0 %857
    %859 = vrot.lane.b32.xlu0 %v854, 8
    %v860 = vpop.permute.xlu0 %859
    %861 = vrot.lane.b32.xlu0 %v855, 8
    %v862 = vpop.permute.xlu0 %861
    %863 = vrot.lane.b32.xlu0 %v856, 8
    %v864 = vpop.permute.xlu0 %863
    %865 = vrot.lane.b32.xlu0 %v853, 120
    %v866 = vpop.permute.xlu0 %865
    %867 = vrot.lane.b32.xlu0 %v854, 120
    %v868 = vpop.permute.xlu0 %867
    %869 = vrot.lane.b32.xlu0 %v855, 120
    %v870 = vpop.permute.xlu0 %869
    %871 = vrot.lane.b32.xlu0 %v856, 120
    %v872 = vpop.permute.xlu0 %871
    %v873 = vlaneseq
    %v874 = vshrl.u32 %v873, 7
    %v875 = vadd.s32 %v874, 8
    %v876 = vadd.s32 %v874, 16
    %v877 = vadd.s32 %v874, 24
    %vm878 = vcmp.lt.s32.totalorder %v874, 0
    %v879 = vsub.s32 0, %v874
    %v880 = vsel %vm878, %v879, %v874
    %v881 = vshrl.u32 %v880, 4
    %v882 = vand.u32 %v880, 15
    %v883 = vsub.s32 0, %v882
    %v884 = vsel %vm878, %v883, %v882
    %vm885 = vcmp.lt.s32.totalorder %v875, 0
    %v886 = vsub.s32 0, %v875
    %v887 = vsel %vm885, %v886, %v875
    %v888 = vshrl.u32 %v887, 4
    %v889 = vand.u32 %v887, 15
    %v890 = vsub.s32 0, %v889
    %v891 = vsel %vm885, %v890, %v889
    %vm892 = vcmp.lt.s32.totalorder %v876, 0
    %v893 = vsub.s32 0, %v876
    %v894 = vsel %vm892, %v893, %v876
    %v895 = vshrl.u32 %v894, 4
    %v896 = vand.u32 %v894, 15
    %v897 = vsub.s32 0, %v896
    %v898 = vsel %vm892, %v897, %v896
    %vm899 = vcmp.lt.s32.totalorder %v877, 0
    %v900 = vsub.s32 0, %v877
    %v901 = vsel %vm899, %v900, %v877
    %v902 = vshrl.u32 %v901, 4
    %v903 = vand.u32 %v901, 15
    %v904 = vsub.s32 0, %v903
    %v905 = vsel %vm899, %v904, %v903
    %vm906 = vcmp.ne.s32.totalorder %v884, 0
    %vm907 = vcmp.ne.s32.totalorder %v891, 0
    %vm908 = vcmp.ne.s32.totalorder %v898, 0
    %vm909 = vcmp.ne.s32.totalorder %v905, 0
    %vm910 = vcmp.lt.s32.totalorder %v884, 0
    %vm911 = vcmp.lt.s32.totalorder %v891, 0
    %vm912 = vcmp.lt.s32.totalorder %v898, 0
    %vm913 = vcmp.lt.s32.totalorder %v905, 0
    %vm914 = vmand %vm910, %vm906
    %vm915 = vmand %vm911, %vm907
    %vm916 = vmand %vm912, %vm908
    %vm917 = vmand %vm913, %vm909
    %v918 = vadd.s32 %v884, 16
    %v919 = vadd.s32 %v891, 16
    %v920 = vadd.s32 %v898, 16
    %v921 = vadd.s32 %v905, 16
    %v922 = vsel %vm914, %v918, %v884
    %v923 = vsel %vm915, %v919, %v891
    %v924 = vsel %vm916, %v920, %v898
    %v925 = vsel %vm917, %v921, %v905
    %v926 = vld [vmem:[#allocation5 + $0x100] sm:$0x1]
    %v927 = vlaneseq
    %v928 = vshrl.u32 %v927, 7
    %v929 = vsub.s32 0, %v928
    %v930 = vrot.slane %v926, %v929
    %v931 = vmul.f32 %v858, %v930
    %v932 = vmul.f32 %v860, %v930
    %v933 = vmul.f32 %v862, %v930
    %v934 = vmul.f32 %v864, %v930
    %v935 = vld [vmem:[#allocation5 + $0x101] sm:$0x1]
    %v936 = vlaneseq
    %v937 = vshrl.u32 %v936, 7
    %v938 = vsub.s32 0, %v937
    %v939 = vrot.slane %v935, %v938
    %v940 = vmul.f32 %v853, %v939
    %v941 = vmul.f32 %v854, %v939
    %v942 = vmul.f32 %v855, %v939
    %v943 = vmul.f32 %v856, %v939
    %v944 = vadd.f32 %v931, %v940
    %v945 = vadd.f32 %v932, %v941
    %v946 = vadd.f32 %v933, %v942
    %v947 = vadd.f32 %v934, %v943
    %v948 = vld [vmem:[#allocation5 + $0x102] sm:$0x1]
    %v949 = vlaneseq
    %v950 = vshrl.u32 %v949, 7
    %v951 = vsub.s32 0, %v950
    %v952 = vrot.slane %v948, %v951
    %v953 = vmul.f32 %v866, %v952
    %v954 = vmul.f32 %v868, %v952
    %v955 = vmul.f32 %v870, %v952
    %v956 = vmul.f32 %v872, %v952
    %v957 = vadd.f32 %v944, %v953
    %v958 = vadd.f32 %v945, %v954
    %v959 = vadd.f32 %v946, %v955
    %v960 = vadd.f32 %v947, %v956
    %v961 = vrot.slane %v957, 7
    %v962 = vrot.slane %v958, 7
    %v963 = vrot.slane %v959, 7
    %v964 = vrot.slane %v960, 7
    %vm965 = vcmp.lt.s32.totalorder %v874, 1
    %v966 = vsel %vm965, %v963, %v964
    %v967 = vsel %vm965, %v962, %v963
    %v968 = vsel %vm965, %v961, %v962
    %v969 = vsel %vm965, %v964, %v961
    %v970 = vadd.s32 %v922, 4294967295
    %v971 = vadd.s32 %v923, 4294967295
    %v972 = vadd.s32 %v924, 4294967295
    %v973 = vadd.s32 %v925, 4294967295
    %vm974 = vcmp.ge.s32.totalorder %v970, 0
    %vm975 = vcmp.ge.s32.totalorder %v971, 0
    %vm976 = vcmp.ge.s32.totalorder %v972, 0
    %vm977 = vcmp.ge.s32.totalorder %v973, 0
    %vm978 = vcmp.lt.s32.totalorder %v970, 16
    %vm979 = vcmp.lt.s32.totalorder %v971, 16
    %vm980 = vcmp.lt.s32.totalorder %v972, 16
    %vm981 = vcmp.lt.s32.totalorder %v973, 16
    %vm982 = vmand %vm974, %vm978
    %vm983 = vmand %vm975, %vm979
    %vm984 = vmand %vm976, %vm980
    %vm985 = vmand %vm977, %vm981
    %v986 = vsel %vm982, 1, 0
    %v987 = vsel %vm983, 1, 0
    %v988 = vsel %vm984, 1, 0
    %v989 = vsel %vm985, 1, 0
    %v990 = vcvt.s32.f32 %v986
    %v991 = vcvt.s32.f32 %v987
    %v992 = vcvt.s32.f32 %v988
    %v993 = vcvt.s32.f32 %v989
    %v994 = vmul.f32 %v969, %v990
    %v995 = vmul.f32 %v968, %v991
    %v996 = vmul.f32 %v967, %v992
    %v997 = vmul.f32 %v966, %v993
    %v998 = vlaneseq
    %v999 = vshrl.u32 %v998, 7
    %v1000 = vsub.s32 0, %v999
    %v1001 = vrot.slane %v77, %v1000
    %v1002 = vadd.f32 %v1001, %v994
    %v1003 = vadd.f32 %v1001, %v995
    %v1004 = vadd.f32 %v1001, %v996
    %v1005 = vadd.f32 %v1001, %v997
    %v1006 = vld [vmem:[#allocation5 + $0x103] sm:$0x1]
    %v1007 = vlaneseq
    %v1008 = vshrl.u32 %v1007, 7
    %v1009 = vsub.s32 0, %v1008
    %v1010 = vrot.slane %v1006, %v1009
    %v1011 = vmul.f32 %v858, %v1010
    %v1012 = vmul.f32 %v860, %v1010
    %v1013 = vmul.f32 %v862, %v1010
    %v1014 = vmul.f32 %v864, %v1010
    %v1015 = vld [vmem:[#allocation5 + $0x104] sm:$0x1]
    %v1016 = vlaneseq
    %v1017 = vshrl.u32 %v1016, 7
    %v1018 = vsub.s32 0, %v1017
    %v1019 = vrot.slane %v1015, %v1018
    %v1020 = vmul.f32 %v853, %v1019
    %v1021 = vmul.f32 %v854, %v1019
    %v1022 = vmul.f32 %v855, %v1019
    %v1023 = vmul.f32 %v856, %v1019
    %v1024 = vadd.f32 %v1011, %v1020
    %v1025 = vadd.f32 %v1012, %v1021
    %v1026 = vadd.f32 %v1013, %v1022
    %v1027 = vadd.f32 %v1014, %v1023
    %v1028 = vld [vmem:[#allocation5 + $0x105] sm:$0x1]
    %v1029 = vlaneseq
    %v1030 = vshrl.u32 %v1029, 7
    %v1031 = vsub.s32 0, %v1030
    %v1032 = vrot.slane %v1028, %v1031
    %v1033 = vmul.f32 %v866, %v1032
    %v1034 = vmul.f32 %v868, %v1032
    %v1035 = vmul.f32 %v870, %v1032
    %v1036 = vmul.f32 %v872, %v1032
    %v1037 = vadd.f32 %v1024, %v1033
    %v1038 = vadd.f32 %v1025, %v1034
    %v1039 = vadd.f32 %v1026, %v1035
    %v1040 = vadd.f32 %v1027, %v1036
    %v1041 = vadd.f32 %v1002, %v1037
    %v1042 = vadd.f32 %v1003, %v1038
    %v1043 = vadd.f32 %v1004, %v1039
    %v1044 = vadd.f32 %v1005, %v1040
    %v1045 = vld [vmem:[#allocation5 + $0x106] sm:$0x1]
    %v1046 = vlaneseq
    %v1047 = vshrl.u32 %v1046, 7
    %v1048 = vsub.s32 0, %v1047
    %v1049 = vrot.slane %v1045, %v1048
    %v1050 = vmul.f32 %v858, %v1049
    %v1051 = vmul.f32 %v860, %v1049
    %v1052 = vmul.f32 %v862, %v1049
    %v1053 = vmul.f32 %v864, %v1049
    %v1054 = vld [vmem:[#allocation5 + $0x107] sm:$0x1]
    %v1055 = vlaneseq
    %v1056 = vshrl.u32 %v1055, 7
    %v1057 = vsub.s32 0, %v1056
    %v1058 = vrot.slane %v1054, %v1057
    %v1059 = vmul.f32 %v853, %v1058
    %v1060 = vmul.f32 %v854, %v1058
    %v1061 = vmul.f32 %v855, %v1058
    %v1062 = vmul.f32 %v856, %v1058
    %v1063 = vadd.f32 %v1050, %v1059
    %v1064 = vadd.f32 %v1051, %v1060
    %v1065 = vadd.f32 %v1052, %v1061
    %v1066 = vadd.f32 %v1053, %v1062
    %v1067 = vld [vmem:[#allocation5 + $0x108] sm:$0x1]
    %v1068 = vlaneseq
    %v1069 = vshrl.u32 %v1068, 7
    %v1070 = vsub.s32 0, %v1069
    %v1071 = vrot.slane %v1067, %v1070
    %v1072 = vmul.f32 %v866, %v1071
    %v1073 = vmul.f32 %v868, %v1071
    %v1074 = vmul.f32 %v870, %v1071
    %v1075 = vmul.f32 %v872, %v1071
    %v1076 = vadd.f32 %v1063, %v1072
    %v1077 = vadd.f32 %v1064, %v1073
    %v1078 = vadd.f32 %v1065, %v1074
    %v1079 = vadd.f32 %v1066, %v1075
    %v1080 = vrot.slane %v1076, 1
    %v1081 = vrot.slane %v1077, 1
    %v1082 = vrot.slane %v1078, 1
    %v1083 = vrot.slane %v1079, 1
    %vm1084 = vcmp.lt.s32.totalorder %v874, 7
    %v1085 = vsel %vm1084, %v1082, %v1083
    %v1086 = vsel %vm1084, %v1081, %v1082
    %v1087 = vsel %vm1084, %v1080, %v1081
    %v1088 = vsel %vm1084, %v1083, %v1080
    %v1089 = vadd.s32 %v922, 1
    %v1090 = vadd.s32 %v923, 1
    %v1091 = vadd.s32 %v924, 1
    %v1092 = vadd.s32 %v925, 1
    %vm1093 = vcmp.ge.s32.totalorder %v1089, 0
    %vm1094 = vcmp.ge.s32.totalorder %v1090, 0
    %vm1095 = vcmp.ge.s32.totalorder %v1091, 0
    %vm1096 = vcmp.ge.s32.totalorder %v1092, 0
    %vm1097 = vcmp.lt.s32.totalorder %v1089, 16
    %vm1098 = vcmp.lt.s32.totalorder %v1090, 16
    %vm1099 = vcmp.lt.s32.totalorder %v1091, 16
    %vm1100 = vcmp.lt.s32.totalorder %v1092, 16
    %vm1101 = vmand %vm1093, %vm1097
    %vm1102 = vmand %vm1094, %vm1098
    %vm1103 = vmand %vm1095, %vm1099
    %vm1104 = vmand %vm1096, %vm1100
    %v1105 = vsel %vm1101, 1, 0
    %v1106 = vsel %vm1102, 1, 0
    %v1107 = vsel %vm1103, 1, 0
    %v1108 = vsel %vm1104, 1, 0
    %v1109 = vcvt.s32.f32 %v1105
    %v1110 = vcvt.s32.f32 %v1106
    %v1111 = vcvt.s32.f32 %v1107
    %v1112 = vcvt.s32.f32 %v1108
    %v1113 = vmul.f32 %v1087, %v1109
    %v1114 = vmul.f32 %v1086, %v1110
    %v1115 = vmul.f32 %v1085, %v1111
    %v1116 = vmul.f32 %v1088, %v1112
    %v1117 = vadd.f32 %v1041, %v1113
    %v1118 = vadd.f32 %v1042, %v1114
    %v1119 = vadd.f32 %v1043, %v1115
    %v1120 = vadd.f32 %v1044, %v1116
    %v1121 = vmax.f32 %v1117, 0.0
    %v1122 = vmax.f32 %v1118, 0.0
    %v1123 = vmax.f32 %v1119, 0.0
    %v1124 = vmax.f32 %v1120, 0.0
    %v1125 = vlaneseq
    %v1126 = vshrl.u32 %v1125, 7
    %v1127 = vsub.s32 0, %v1126
    %v1128 = vrot.slane %v78, %v1127
    %1129 = vmatprep.subr.mxu0 0.0
    %v1130 = vand.u32 %v60, 4294901760
    %1131 = vmatpush1.msra.mxu0 %v1130
    %1132 = vmatprep.subr.mxu0 0.0
    %v1133 = vand.u32 %v61, 4294901760
    %1134 = vmatpush1.msra.mxu0 %v1133
    %1135 = vmatprep.subr.mxu0 0.0
    %v1136 = vand.u32 %v62, 4294901760
    %1137 = vmatpush1.msra.mxu0 %v1136
    %1138 = vmatprep.subr.mxu0 0.0
    %v1139 = vand.u32 %v63, 4294901760
    %1140 = vmatpush1.msra.mxu0 %v1139
    %1141 = vmatprep.subr.mxu0 0.0
    %v1142 = vand.u32 %v64, 4294901760
    %1143 = vmatpush1.msra.mxu0 %v1142
    %1144 = vmatprep.subr.mxu0 0.0
    %v1145 = vand.u32 %v65, 4294901760
    %1146 = vmatpush1.msra.mxu0 %v1145
    %1147 = vmatprep.subr.mxu0 0.0
    %v1148 = vand.u32 %v66, 4294901760
    %1149 = vmatpush1.msra.mxu0 %v1148
    %1150 = vmatprep.subr.mxu0 0.0
    %v1151 = vand.u32 %v67, 4294901760
    %1152 = vmatpush1.msra.mxu0 %v1151
    %1153 = vmatprep.subr.mxu0 0.0
    %v1154 = vand.u32 %v68, 4294901760
    %1155 = vmatpush1.msra.mxu0 %v1154
    %1156 = vmatprep.subr.mxu0 0.0
    %v1157 = vand.u32 %v69, 4294901760
    %1158 = vmatpush1.msra.mxu0 %v1157
    %1159 = vmatprep.subr.mxu0 0.0
    %v1160 = vand.u32 %v70, 4294901760
    %1161 = vmatpush1.msra.mxu0 %v1160
    %1162 = vmatprep.subr.mxu0 0.0
    %v1163 = vand.u32 %v71, 4294901760
    %1164 = vmatpush1.msra.mxu0 %v1163
    %1165 = vmatprep.subr.mxu0 0.0
    %v1166 = vand.u32 %v72, 4294901760
    %1167 = vmatpush1.msra.mxu0 %v1166
    %1168 = vmatprep.subr.mxu0 0.0
    %v1169 = vand.u32 %v73, 4294901760
    %1170 = vmatpush1.msra.mxu0 %v1169
    %1171 = vmatprep.subr.mxu0 0.0
    %v1172 = vand.u32 %v74, 4294901760
    %1173 = vmatpush1.msra.mxu0 %v1172
    %1174 = vmatprep.subr.mxu0 0.0
    %v1175 = vand.u32 %v75, 4294901760
    %1176 = vmatpush1.msra.mxu0 %v1175
    %1177 = vmatprep.subr.mxu0 0.0
    %1178 = vmatpush1.msra.mxu0 0.0
    %1179 = vmatprep.subr.mxu0 0.0
    %1180 = vmatpush1.msra.mxu0 0.0
    %1181 = vmatprep.subr.mxu0 0.0
    %1182 = vmatpush1.msra.mxu0 0.0
    %1183 = vmatprep.subr.mxu0 0.0
    %1184 = vmatpush1.msra.mxu0 0.0
    %1185 = vmatprep.subr.mxu0 0.0
    %1186 = vmatpush1.msra.mxu0 0.0
    %1187 = vmatprep.subr.mxu0 0.0
    %1188 = vmatpush1.msra.mxu0 0.0
    %1189 = vmatprep.subr.mxu0 0.0
    %1190 = vmatpush1.msra.mxu0 0.0
    %1191 = vmatprep.subr.mxu0 0.0
    %1192 = vmatpush1.msra.mxu0 0.0
    %1193 = vmatprep.subr.mxu0 0.0
    %1194 = vmatpush1.msra.mxu0 0.0
    %1195 = vmatprep.subr.mxu0 0.0
    %1196 = vmatpush1.msra.mxu0 0.0
    %1197 = vmatprep.subr.mxu0 0.0
    %1198 = vmatpush1.msra.mxu0 0.0
    %1199 = vmatprep.subr.mxu0 0.0
    %1200 = vmatpush1.msra.mxu0 0.0
    %1201 = vmatprep.subr.mxu0 0.0
    %1202 = vmatpush1.msra.mxu0 0.0
    %1203 = vmatprep.subr.mxu0 0.0
    %1204 = vmatpush1.msra.mxu0 0.0
    %1205 = vmatprep.subr.mxu0 0.0
    %1206 = vmatpush1.msra.mxu0 0.0
    %1207 = vmatprep.subr.mxu0 0.0
    %1208 = vmatpush1.msra.mxu0 0.0
    %1209 = vmatprep.mubr.f32.mxu0 0.0
    %v1210 = vand.u32 %v1121, 4294901760
    %v1211 = vsub.f32 %v1121, %v1210
    %v1212 = vand.u32 %v1211, 4294901760
    %v1213 = vsub.f32 %v1211, %v1212
    %v1214 = vand.u32 %v1213, 4294901760
    %1215 = vmatmul.mubr.f32.gmra.mrb[0].mxu0 %v1214
    %v1216 = vpop.f32.mrb[0].mxu0
    %v1217 = vadd.f32 %v1128, %v1216
    %v1218 = vpop.f32.mrb[0].mxu0
    %1219 = vmatprep.mubr.f32.mxu0 0.0
    %v1220 = vand.u32 %v1122, 4294901760
    %v1221 = vsub.f32 %v1122, %v1220
    %v1222 = vand.u32 %v1221, 4294901760
    %v1223 = vsub.f32 %v1221, %v1222
    %v1224 = vand.u32 %v1223, 4294901760
    %1225 = vmatmul.mubr.f32.gmra.mrb[0].mxu0 %v1224
    %v1226 = vpop.f32.mrb[0].mxu0
    %v1227 = vadd.f32 %v1128, %v1226
    %v1228 = vpop.f32.mrb[0].mxu0
    %1229 = vmatprep.mubr.f32.mxu0 0.0
    %v1230 = vand.u32 %v1123, 4294901760
    %v1231 = vsub.f32 %v1123, %v1230
    %v1232 = vand.u32 %v1231, 4294901760
    %v1233 = vsub.f32 %v1231, %v1232
    %v1234 = vand.u32 %v1233, 4294901760
    %1235 = vmatmul.mubr.f32.gmra.mrb[0].mxu0 %v1234
    %v1236 = vpop.f32.mrb[0].mxu0
    %v1237 = vadd.f32 %v1128, %v1236
    %v1238 = vpop.f32.mrb[0].mxu0
    %1239 = vmatprep.mubr.f32.mxu0 0.0
    %v1240 = vand.u32 %v1124, 4294901760
    %v1241 = vsub.f32 %v1124, %v1240
    %v1242 = vand.u32 %v1241, 4294901760
    %v1243 = vsub.f32 %v1241, %v1242
    %v1244 = vand.u32 %v1243, 4294901760
    %1245 = vmatmul.mubr.f32.gmra.mrb[0].mxu0 %v1244
    %v1246 = vpop.f32.mrb[0].mxu0
    %v1247 = vadd.f32 %v1128, %v1246
    %v1248 = vpop.f32.mrb[0].mxu0
    %1249 = vdwg.mxu0
    %1250 = vmatprep.subr.mxu0 0.0
    %v1251 = vand.u32 %v60, 4294901760
    %v1252 = vsub.f32 %v60, %v1251
    %v1253 = vand.u32 %v1252, 4294901760
    %v1254 = vsub.f32 %v1252, %v1253
    %v1255 = vand.u32 %v1254, 4294901760
    %1256 = vmatpush1.msra.mxu0 %v1255
    %1257 = vmatprep.subr.mxu0 0.0
    %v1258 = vand.u32 %v61, 4294901760
    %v1259 = vsub.f32 %v61, %v1258
    %v1260 = vand.u32 %v1259, 4294901760
    %v1261 = vsub.f32 %v1259, %v1260
    %v1262 = vand.u32 %v1261, 4294901760
    %1263 = vmatpush1.msra.mxu0 %v1262
    %1264 = vmatprep.subr.mxu0 0.0
    %v1265 = vand.u32 %v62, 4294901760
    %v1266 = vsub.f32 %v62, %v1265
    %v1267 = vand.u32 %v1266, 4294901760
    %v1268 = vsub.f32 %v1266, %v1267
    %v1269 = vand.u32 %v1268, 4294901760
    %1270 = vmatpush1.msra.mxu0 %v1269
    %1271 = vmatprep.subr.mxu0 0.0
    %v1272 = vand.u32 %v63, 4294901760
    %v1273 = vsub.f32 %v63, %v1272
    %v1274 = vand.u32 %v1273, 4294901760
    %v1275 = vsub.f32 %v1273, %v1274
    %v1276 = vand.u32 %v1275, 4294901760
    %1277 = vmatpush1.msra.mxu0 %v1276
    %1278 = vmatprep.subr.mxu0 0.0
    %v1279 = vand.u32 %v64, 4294901760
    %v1280 = vsub.f32 %v64, %v1279
    %v1281 = vand.u32 %v1280, 4294901760
    %v1282 = vsub.f32 %v1280, %v1281
    %v1283 = vand.u32 %v1282, 4294901760
    %1284 = vmatpush1.msra.mxu0 %v1283
    %1285 = vmatprep.subr.mxu0 0.0
    %v1286 = vand.u32 %v65, 4294901760
    %v1287 = vsub.f32 %v65, %v1286
    %v1288 = vand.u32 %v1287, 4294901760
    %v1289 = vsub.f32 %v1287, %v1288
    %v1290 = vand.u32 %v1289, 4294901760
    %1291 = vmatpush1.msra.mxu0 %v1290
    %1292 = vmatprep.subr.mxu0 0.0
    %v1293 = vand.u32 %v66, 4294901760
    %v1294 = vsub.f32 %v66, %v1293
    %v1295 = vand.u32 %v1294, 4294901760
    %v1296 = vsub.f32 %v1294, %v1295
    %v1297 = vand.u32 %v1296, 4294901760
    %1298 = vmatpush1.msra.mxu0 %v1297
    %1299 = vmatprep.subr.mxu0 0.0
    %v1300 = vand.u32 %v67, 4294901760
    %v1301 = vsub.f32 %v67, %v1300
    %v1302 = vand.u32 %v1301, 4294901760
    %v1303 = vsub.f32 %v1301, %v1302
    %v1304 = vand.u32 %v1303, 4294901760
    %1305 = vmatpush1.msra.mxu0 %v1304
    %1306 = vmatprep.subr.mxu0 0.0
    %v1307 = vand.u32 %v68, 4294901760
    %v1308 = vsub.f32 %v68, %v1307
    %v1309 = vand.u32 %v1308, 4294901760
    %v1310 = vsub.f32 %v1308, %v1309
    %v1311 = vand.u32 %v1310, 4294901760
    %1312 = vmatpush1.msra.mxu0 %v1311
    %1313 = vmatprep.subr.mxu0 0.0
    %v1314 = vand.u32 %v69, 4294901760
    %v1315 = vsub.f32 %v69, %v1314
    %v1316 = vand.u32 %v1315, 4294901760
    %v1317 = vsub.f32 %v1315, %v1316
    %v1318 = vand.u32 %v1317, 4294901760
    %1319 = vmatpush1.msra.mxu0 %v1318
    %1320 = vmatprep.subr.mxu0 0.0
    %v1321 = vand.u32 %v70, 4294901760
    %v1322 = vsub.f32 %v70, %v1321
    %v1323 = vand.u32 %v1322, 4294901760
    %v1324 = vsub.f32 %v1322, %v1323
    %v1325 = vand.u32 %v1324, 4294901760
    %1326 = vmatpush1.msra.mxu0 %v1325
    %1327 = vmatprep.subr.mxu0 0.0
    %v1328 = vand.u32 %v71, 4294901760
    %v1329 = vsub.f32 %v71, %v1328
    %v1330 = vand.u32 %v1329, 4294901760
    %v1331 = vsub.f32 %v1329, %v1330
    %v1332 = vand.u32 %v1331, 4294901760
    %1333 = vmatpush1.msra.mxu0 %v1332
    %1334 = vmatprep.subr.mxu0 0.0
    %v1335 = vand.u32 %v72, 4294901760
    %v1336 = vsub.f32 %v72, %v1335
    %v1337 = vand.u32 %v1336, 4294901760
    %v1338 = vsub.f32 %v1336, %v1337
    %v1339 = vand.u32 %v1338, 4294901760
    %1340 = vmatpush1.msra.mxu0 %v1339
    %1341 = vmatprep.subr.mxu0 0.0
    %v1342 = vand.u32 %v73, 4294901760
    %v1343 = vsub.f32 %v73, %v1342
    %v1344 = vand.u32 %v1343, 4294901760
    %v1345 = vsub.f32 %v1343, %v1344
    %v1346 = vand.u32 %v1345, 4294901760
    %1347 = vmatpush1.msra.mxu0 %v1346
    %1348 = vmatprep.subr.mxu0 0.0
    %v1349 = vand.u32 %v74, 4294901760
    %v1350 = vsub.f32 %v74, %v1349
    %v1351 = vand.u32 %v1350, 4294901760
    %v1352 = vsub.f32 %v1350, %v1351
    %v1353 = vand.u32 %v1352, 4294901760
    %1354 = vmatpush1.msra.mxu0 %v1353
    %1355 = vmatprep.subr.mxu0 0.0
    %v1356 = vand.u32 %v75, 4294901760
    %v1357 = vsub.f32 %v75, %v1356
    %v1358 = vand.u32 %v1357, 4294901760
    %v1359 = vsub.f32 %v1357, %v1358
    %v1360 = vand.u32 %v1359, 4294901760
    %1361 = vmatpush1.msra.mxu0 %v1360
    %1362 = vmatprep.subr.mxu0 0.0
    %1363 = vmatpush1.msra.mxu0 0.0
    %1364 = vmatprep.subr.mxu0 0.0
    %1365 = vmatpush1.msra.mxu0 0.0
    %1366 = vmatprep.subr.mxu0 0.0
    %1367 = vmatpush1.msra.mxu0 0.0
    %1368 = vmatprep.subr.mxu0 0.0
    %1369 = vmatpush1.msra.mxu0 0.0
    %1370 = vmatprep.subr.mxu0 0.0
    %1371 = vmatpush1.msra.mxu0 0.0
    %1372 = vmatprep.subr.mxu0 0.0
    %1373 = vmatpush1.msra.mxu0 0.0
    %1374 = vmatprep.subr.mxu0 0.0
    %1375 = vmatpush1.msra.mxu0 0.0
    %1376 = vmatprep.subr.mxu0 0.0
    %1377 = vmatpush1.msra.mxu0 0.0
    %1378 = vmatprep.subr.mxu0 0.0
    %1379 = vmatpush1.msra.mxu0 0.0
    %1380 = vmatprep.subr.mxu0 0.0
    %1381 = vmatpush1.msra.mxu0 0.0
    %1382 = vmatprep.subr.mxu0 0.0
    %1383 = vmatpush1.msra.mxu0 0.0
    %1384 = vmatprep.subr.mxu0 0.0
    %1385 = vmatpush1.msra.mxu0 0.0
    %1386 = vmatprep.subr.mxu0 0.0
    %1387 = vmatpush1.msra.mxu0 0.0
    %1388 = vmatprep.subr.mxu0 0.0
    %1389 = vmatpush1.msra.mxu0 0.0
    %1390 = vmatprep.subr.mxu0 0.0
    %1391 = vmatpush1.msra.mxu0 0.0
    %1392 = vmatprep.subr.mxu0 0.0
    %1393 = vmatpush1.msra.mxu0 0.0
    %1394 = vmatprep.mubr.f32.mxu0 0.0
    %v1395 = vand.u32 %v1121, 4294901760
    %1396 = vmatmul.mubr.f32.gmra.mrb[0].mxu0 %v1395
    %v1397 = vpop.f32.mrb[0].mxu0
    %v1398 = vadd.f32 %v1217, %v1397
    %v1399 = vpop.f32.mrb[0].mxu0
    %1400 = vmatprep.mubr.f32.mxu0 0.0
    %v1401 = vand.u32 %v1122, 4294901760
    %1402 = vmatmul.mubr.f32.gmra.mrb[0].mxu0 %v1401
    %v1403 = vpop.f32.mrb[0].mxu0
    %v1404 = vadd.f32 %v1227, %v1403
    %v1405 = vpop.f32.mrb[0].mxu0
    %1406 = vmatprep.mubr.f32.mxu0 0.0
    %v1407 = vand.u32 %v1123, 4294901760
    %1408 = vmatmul.mubr.f32.gmra.mrb[0].mxu0 %v1407
    %v1409 = vpop.f32.mrb[0].mxu0
    %v1410 = vadd.f32 %v1237, %v1409
    %v1411 = vpop.f32.mrb[0].mxu0
    %1412 = vmatprep.mubr.f32.mxu0 0.0
    %v1413 = vand.u32 %v1124, 4294901760
    %1414 = vmatmul.mubr.f32.gmra.mrb[0].mxu0 %v1413
    %v1415 = vpop.f32.mrb[0].mxu0
    %v1416 = vadd.f32 %v1247, %v1415
    %v1417 = vpop.f32.mrb[0].mxu0
    %1418 = vdwg.mxu0
    %1419 = vmatprep.subr.mxu0 0.0
    %v1420 = vand.u32 %v60, 4294901760
    %v1421 = vsub.f32 %v60, %v1420
    %1422 = vmatpush1.msra.mxu0 %v1421
    %1423 = vmatprep.subr.mxu0 0.0
    %v1424 = vand.u32 %v61, 4294901760
    %v1425 = vsub.f32 %v61, %v1424
    %1426 = vmatpush1.msra.mxu0 %v1425
    %1427 = vmatprep.subr.mxu0 0.0
    %v1428 = vand.u32 %v62, 4294901760
    %v1429 = vsub.f32 %v62, %v1428
    %1430 = vmatpush1.msra.mxu0 %v1429
    %1431 = vmatprep.subr.mxu0 0.0
    %v1432 = vand.u32 %v63, 4294901760
    %v1433 = vsub.f32 %v63, %v1432
    %1434 = vmatpush1.msra.mxu0 %v1433
    %1435 = vmatprep.subr.mxu0 0.0
    %v1436 = vand.u32 %v64, 4294901760
    %v1437 = vsub.f32 %v64, %v1436
    %1438 = vmatpush1.msra.mxu0 %v1437
    %1439 = vmatprep.subr.mxu0 0.0
    %v1440 = vand.u32 %v65, 4294901760
    %v1441 = vsub.f32 %v65, %v1440
    %1442 = vmatpush1.msra.mxu0 %v1441
    %1443 = vmatprep.subr.mxu0 0.0
    %v1444 = vand.u32 %v66, 4294901760
    %v1445 = vsub.f32 %v66, %v1444
    %1446 = vmatpush1.msra.mxu0 %v1445
    %1447 = vmatprep.subr.mxu0 0.0
    %v1448 = vand.u32 %v67, 4294901760
    %v1449 = vsub.f32 %v67, %v1448
    %1450 = vmatpush1.msra.mxu0 %v1449
    %1451 = vmatprep.subr.mxu0 0.0
    %v1452 = vand.u32 %v68, 4294901760
    %v1453 = vsub.f32 %v68, %v1452
    %1454 = vmatpush1.msra.mxu0 %v1453
    %1455 = vmatprep.subr.mxu0 0.0
    %v1456 = vand.u32 %v69, 4294901760
    %v1457 = vsub.f32 %v69, %v1456
    %1458 = vmatpush1.msra.mxu0 %v1457
    %1459 = vmatprep.subr.mxu0 0.0
    %v1460 = vand.u32 %v70, 4294901760
    %v1461 = vsub.f32 %v70, %v1460
    %1462 = vmatpush1.msra.mxu0 %v1461
    %1463 = vmatprep.subr.mxu0 0.0
    %v1464 = vand.u32 %v71, 4294901760
    %v1465 = vsub.f32 %v71, %v1464
    %1466 = vmatpush1.msra.mxu0 %v1465
    %1467 = vmatprep.subr.mxu0 0.0
    %v1468 = vand.u32 %v72, 4294901760
    %v1469 = vsub.f32 %v72, %v1468
    %1470 = vmatpush1.msra.mxu0 %v1469
    %1471 = vmatprep.subr.mxu0 0.0
    %v1472 = vand.u32 %v73, 4294901760
    %v1473 = vsub.f32 %v73, %v1472
    %1474 = vmatpush1.msra.mxu0 %v1473
    %1475 = vmatprep.subr.mxu0 0.0
    %v1476 = vand.u32 %v74, 4294901760
    %v1477 = vsub.f32 %v74, %v1476
    %1478 = vmatpush1.msra.mxu0 %v1477
    %1479 = vmatprep.subr.mxu0 0.0
    %v1480 = vand.u32 %v75, 4294901760
    %v1481 = vsub.f32 %v75, %v1480
    %1482 = vmatpush1.msra.mxu0 %v1481
    %1483 = vmatprep.subr.mxu0 0.0
    %1484 = vmatpush1.msra.mxu0 0.0
    %1485 = vmatprep.subr.mxu0 0.0
    %1486 = vmatpush1.msra.mxu0 0.0
    %1487 = vmatprep.subr.mxu0 0.0
    %1488 = vmatpush1.msra.mxu0 0.0
    %1489 = vmatprep.subr.mxu0 0.0
    %1490 = vmatpush1.msra.mxu0 0.0
    %1491 = vmatprep.subr.mxu0 0.0
    %1492 = vmatpush1.msra.mxu0 0.0
    %1493 = vmatprep.subr.mxu0 0.0
    %1494 = vmatpush1.msra.mxu0 0.0
    %1495 = vmatprep.subr.mxu0 0.0
    %1496 = vmatpush1.msra.mxu0 0.0
    %1497 = vmatprep.subr.mxu0 0.0
    %1498 = vmatpush1.msra.mxu0 0.0
    %1499 = vmatprep.subr.mxu0 0.0
    %1500 = vmatpush1.msra.mxu0 0.0
    %1501 = vmatprep.subr.mxu0 0.0
    %1502 = vmatpush1.msra.mxu0 0.0
    %1503 = vmatprep.subr.mxu0 0.0
    %1504 = vmatpush1.msra.mxu0 0.0
    %1505 = vmatprep.subr.mxu0 0.0
    %1506 = vmatpush1.msra.mxu0 0.0
    %1507 = vmatprep.subr.mxu0 0.0
    %1508 = vmatpush1.msra.mxu0 0.0
    %1509 = vmatprep.subr.mxu0 0.0
    %1510 = vmatpush1.msra.mxu0 0.0
    %1511 = vmatprep.subr.mxu0 0.0
    %1512 = vmatpush1.msra.mxu0 0.0
    %1513 = vmatprep.subr.mxu0 0.0
    %1514 = vmatpush1.msra.mxu0 0.0
    %1515 = vmatprep.mubr.f32.mxu0 0.0
    %v1516 = vand.u32 %v1121, 4294901760
    %v1517 = vsub.f32 %v1121, %v1516
    %1518 = vmatmul.mubr.f32.gmra.mrb[0].mxu0 %v1517
    %v1519 = vpop.f32.mrb[0].mxu0
    %v1520 = vadd.f32 %v1398, %v1519
    %v1521 = vpop.f32.mrb[0].mxu0
    %1522 = vmatprep.mubr.f32.mxu0 0.0
    %v1523 = vand.u32 %v1122, 4294901760
    %v1524 = vsub.f32 %v1122, %v1523
    %1525 = vmatmul.mubr.f32.gmra.mrb[0].mxu0 %v1524
    %v1526 = vpop.f32.mrb[0].mxu0
    %v1527 = vadd.f32 %v1404, %v1526
    %v1528 = vpop.f32.mrb[0].mxu0
    %1529 = vmatprep.mubr.f32.mxu0 0.0
    %v1530 = vand.u32 %v1123, 4294901760
    %v1531 = vsub.f32 %v1123, %v1530
    %1532 = vmatmul.mubr.f32.gmra.mrb[0].mxu0 %v1531
    %v1533 = vpop.f32.mrb[0].mxu0
    %v1534 = vadd.f32 %v1410, %v1533
    %v1535 = vpop.f32.mrb[0].mxu0
    %1536 = vmatprep.mubr.f32.mxu0 0.0
    %v1537 = vand.u32 %v1124, 4294901760
    %v1538 = vsub.f32 %v1124, %v1537
    %1539 = vmatmul.mubr.f32.gmra.mrb[0].mxu0 %v1538
    %v1540 = vpop.f32.mrb[0].mxu0
    %v1541 = vadd.f32 %v1416, %v1540
    %v1542 = vpop.f32.mrb[0].mxu0
    %1543 = vdwg.mxu0
    %1544 = vmatprep.subr.mxu0 0.0
    %v1545 = vand.u32 %v60, 4294901760
    %1546 = vmatpush1.msra.mxu0 %v1545
    %1547 = vmatprep.subr.mxu0 0.0
    %v1548 = vand.u32 %v61, 4294901760
    %1549 = vmatpush1.msra.mxu0 %v1548
    %1550 = vmatprep.subr.mxu0 0.0
    %v1551 = vand.u32 %v62, 4294901760
    %1552 = vmatpush1.msra.mxu0 %v1551
    %1553 = vmatprep.subr.mxu0 0.0
    %v1554 = vand.u32 %v63, 4294901760
    %1555 = vmatpush1.msra.mxu0 %v1554
    %1556 = vmatprep.subr.mxu0 0.0
    %v1557 = vand.u32 %v64, 4294901760
    %1558 = vmatpush1.msra.mxu0 %v1557
    %1559 = vmatprep.subr.mxu0 0.0
    %v1560 = vand.u32 %v65, 4294901760
    %1561 = vmatpush1.msra.mxu0 %v1560
    %1562 = vmatprep.subr.mxu0 0.0
    %v1563 = vand.u32 %v66, 4294901760
    %1564 = vmatpush1.msra.mxu0 %v1563
    %1565 = vmatprep.subr.mxu0 0.0
    %v1566 = vand.u32 %v67, 4294901760
    %1567 = vmatpush1.msra.mxu0 %v1566
    %1568 = vmatprep.subr.mxu0 0.0
    %v1569 = vand.u32 %v68, 4294901760
    %1570 = vmatpush1.msra.mxu0 %v1569
    %1571 = vmatprep.subr.mxu0 0.0
    %v1572 = vand.u32 %v69, 4294901760
    %1573 = vmatpush1.msra.mxu0 %v1572
    %1574 = vmatprep.subr.mxu0 0.0
    %v1575 = vand.u32 %v70, 4294901760
    %1576 = vmatpush1.msra.mxu0 %v1575
    %1577 = vmatprep.subr.mxu0 0.0
    %v1578 = vand.u32 %v71, 4294901760
    %1579 = vmatpush1.msra.mxu0 %v1578
    %1580 = vmatprep.subr.mxu0 0.0
    %v1581 = vand.u32 %v72, 4294901760
    %1582 = vmatpush1.msra.mxu0 %v1581
    %1583 = vmatprep.subr.mxu0 0.0
    %v1584 = vand.u32 %v73, 4294901760
    %1585 = vmatpush1.msra.mxu0 %v1584
    %1586 = vmatprep.subr.mxu0 0.0
    %v1587 = vand.u32 %v74, 4294901760
    %1588 = vmatpush1.msra.mxu0 %v1587
    %1589 = vmatprep.subr.mxu0 0.0
    %v1590 = vand.u32 %v75, 4294901760
    %1591 = vmatpush1.msra.mxu0 %v1590
    %1592 = vmatprep.subr.mxu0 0.0
    %1593 = vmatpush1.msra.mxu0 0.0
    %1594 = vmatprep.subr.mxu0 0.0
    %1595 = vmatpush1.msra.mxu0 0.0
    %1596 = vmatprep.subr.mxu0 0.0
    %1597 = vmatpush1.msra.mxu0 0.0
    %1598 = vmatprep.subr.mxu0 0.0
    %1599 = vmatpush1.msra.mxu0 0.0
    %1600 = vmatprep.subr.mxu0 0.0
    %1601 = vmatpush1.msra.mxu0 0.0
    %1602 = vmatprep.subr.mxu0 0.0
    %1603 = vmatpush1.msra.mxu0 0.0
    %1604 = vmatprep.subr.mxu0 0.0
    %1605 = vmatpush1.msra.mxu0 0.0
    %1606 = vmatprep.subr.mxu0 0.0
    %1607 = vmatpush1.msra.mxu0 0.0
    %1608 = vmatprep.subr.mxu0 0.0
    %1609 = vmatpush1.msra.mxu0 0.0
    %1610 = vmatprep.subr.mxu0 0.0
    %1611 = vmatpush1.msra.mxu0 0.0
    %1612 = vmatprep.subr.mxu0 0.0
    %1613 = vmatpush1.msra.mxu0 0.0
    %1614 = vmatprep.subr.mxu0 0.0
    %1615 = vmatpush1.msra.mxu0 0.0
    %1616 = vmatprep.subr.mxu0 0.0
    %1617 = vmatpush1.msra.mxu0 0.0
    %1618 = vmatprep.subr.mxu0 0.0
    %1619 = vmatpush1.msra.mxu0 0.0
    %1620 = vmatprep.subr.mxu0 0.0
    %1621 = vmatpush1.msra.mxu0 0.0
    %1622 = vmatprep.subr.mxu0 0.0
    %1623 = vmatpush1.msra.mxu0 0.0
    %1624 = vmatprep.mubr.f32.mxu0 0.0
    %v1625 = vand.u32 %v1121, 4294901760
    %v1626 = vsub.f32 %v1121, %v1625
    %v1627 = vand.u32 %v1626, 4294901760
    %1628 = vmatmul.mubr.f32.gmra.mrb[0].mxu0 %v1627
    %v1629 = vpop.f32.mrb[0].mxu0
    %v1630 = vadd.f32 %v1520, %v1629
    %v1631 = vpop.f32.mrb[0].mxu0
    %1632 = vmatprep.mubr.f32.mxu0 0.0
    %v1633 = vand.u32 %v1122, 4294901760
    %v1634 = vsub.f32 %v1122, %v1633
    %v1635 = vand.u32 %v1634, 4294901760
    %1636 = vmatmul.mubr.f32.gmra.mrb[0].mxu0 %v1635
    %v1637 = vpop.f32.mrb[0].mxu0
    %v1638 = vadd.f32 %v1527, %v1637
    %v1639 = vpop.f32.mrb[0].mxu0
    %1640 = vmatprep.mubr.f32.mxu0 0.0
    %v1641 = vand.u32 %v1123, 4294901760
    %v1642 = vsub.f32 %v1123, %v1641
    %v1643 = vand.u32 %v1642, 4294901760
    %1644 = vmatmul.mubr.f32.gmra.mrb[0].mxu0 %v1643
    %v1645 = vpop.f32.mrb[0].mxu0
    %v1646 = vadd.f32 %v1534, %v1645
    %v1647 = vpop.f32.mrb[0].mxu0
    %1648 = vmatprep.mubr.f32.mxu0 0.0
    %v1649 = vand.u32 %v1124, 4294901760
    %v1650 = vsub.f32 %v1124, %v1649
    %v1651 = vand.u32 %v1650, 4294901760
    %1652 = vmatmul.mubr.f32.gmra.mrb[0].mxu0 %v1651
    %v1653 = vpop.f32.mrb[0].mxu0
    %v1654 = vadd.f32 %v1541, %v1653
    %v1655 = vpop.f32.mrb[0].mxu0
    %1656 = vdwg.mxu0
    %1657 = vmatprep.subr.mxu0 0.0
    %v1658 = vand.u32 %v60, 4294901760
    %v1659 = vsub.f32 %v60, %v1658
    %v1660 = vand.u32 %v1659, 4294901760
    %1661 = vmatpush1.msra.mxu0 %v1660
    %1662 = vmatprep.subr.mxu0 0.0
    %v1663 = vand.u32 %v61, 4294901760
    %v1664 = vsub.f32 %v61, %v1663
    %v1665 = vand.u32 %v1664, 4294901760
    %1666 = vmatpush1.msra.mxu0 %v1665
    %1667 = vmatprep.subr.mxu0 0.0
    %v1668 = vand.u32 %v62, 4294901760
    %v1669 = vsub.f32 %v62, %v1668
    %v1670 = vand.u32 %v1669, 4294901760
    %1671 = vmatpush1.msra.mxu0 %v1670
    %1672 = vmatprep.subr.mxu0 0.0
    %v1673 = vand.u32 %v63, 4294901760
    %v1674 = vsub.f32 %v63, %v1673
    %v1675 = vand.u32 %v1674, 4294901760
    %1676 = vmatpush1.msra.mxu0 %v1675
    %1677 = vmatprep.subr.mxu0 0.0
    %v1678 = vand.u32 %v64, 4294901760
    %v1679 = vsub.f32 %v64, %v1678
    %v1680 = vand.u32 %v1679, 4294901760
    %1681 = vmatpush1.msra.mxu0 %v1680
    %1682 = vmatprep.subr.mxu0 0.0
    %v1683 = vand.u32 %v65, 4294901760
    %v1684 = vsub.f32 %v65, %v1683
    %v1685 = vand.u32 %v1684, 4294901760
    %1686 = vmatpush1.msra.mxu0 %v1685
    %1687 = vmatprep.subr.mxu0 0.0
    %v1688 = vand.u32 %v66, 4294901760
    %v1689 = vsub.f32 %v66, %v1688
    %v1690 = vand.u32 %v1689, 4294901760
    %1691 = vmatpush1.msra.mxu0 %v1690
    %1692 = vmatprep.subr.mxu0 0.0
    %v1693 = vand.u32 %v67, 4294901760
    %v1694 = vsub.f32 %v67, %v1693
    %v1695 = vand.u32 %v1694, 4294901760
    %1696 = vmatpush1.msra.mxu0 %v1695
    %1697 = vmatprep.subr.mxu0 0.0
    %v1698 = vand.u32 %v68, 4294901760
    %v1699 = vsub.f32 %v68, %v1698
    %v1700 = vand.u32 %v1699, 4294901760
    %1701 = vmatpush1.msra.mxu0 %v1700
    %1702 = vmatprep.subr.mxu0 0.0
    %v1703 = vand.u32 %v69, 4294901760
    %v1704 = vsub.f32 %v69, %v1703
    %v1705 = vand.u32 %v1704, 4294901760
    %1706 = vmatpush1.msra.mxu0 %v1705
    %1707 = vmatprep.subr.mxu0 0.0
    %v1708 = vand.u32 %v70, 4294901760
    %v1709 = vsub.f32 %v70, %v1708
    %v1710 = vand.u32 %v1709, 4294901760
    %1711 = vmatpush1.msra.mxu0 %v1710
    %1712 = vmatprep.subr.mxu0 0.0
    %v1713 = vand.u32 %v71, 4294901760
    %v1714 = vsub.f32 %v71, %v1713
    %v1715 = vand.u32 %v1714, 4294901760
    %1716 = vmatpush1.msra.mxu0 %v1715
    %1717 = vmatprep.subr.mxu0 0.0
    %v1718 = vand.u32 %v72, 4294901760
    %v1719 = vsub.f32 %v72, %v1718
    %v1720 = vand.u32 %v1719, 4294901760
    %1721 = vmatpush1.msra.mxu0 %v1720
    %1722 = vmatprep.subr.mxu0 0.0
    %v1723 = vand.u32 %v73, 4294901760
    %v1724 = vsub.f32 %v73, %v1723
    %v1725 = vand.u32 %v1724, 4294901760
    %1726 = vmatpush1.msra.mxu0 %v1725
    %1727 = vmatprep.subr.mxu0 0.0
    %v1728 = vand.u32 %v74, 4294901760
    %v1729 = vsub.f32 %v74, %v1728
    %v1730 = vand.u32 %v1729, 4294901760
    %1731 = vmatpush1.msra.mxu0 %v1730
    %1732 = vmatprep.subr.mxu0 0.0
    %v1733 = vand.u32 %v75, 4294901760
    %v1734 = vsub.f32 %v75, %v1733
    %v1735 = vand.u32 %v1734, 4294901760
    %1736 = vmatpush1.msra.mxu0 %v1735
    %1737 = vmatprep.subr.mxu0 0.0
    %1738 = vmatpush1.msra.mxu0 0.0
    %1739 = vmatprep.subr.mxu0 0.0
    %1740 = vmatpush1.msra.mxu0 0.0
    %1741 = vmatprep.subr.mxu0 0.0
    %1742 = vmatpush1.msra.mxu0 0.0
    %1743 = vmatprep.subr.mxu0 0.0
    %1744 = vmatpush1.msra.mxu0 0.0
    %1745 = vmatprep.subr.mxu0 0.0
    %1746 = vmatpush1.msra.mxu0 0.0
    %1747 = vmatprep.subr.mxu0 0.0
    %1748 = vmatpush1.msra.mxu0 0.0
    %1749 = vmatprep.subr.mxu0 0.0
    %1750 = vmatpush1.msra.mxu0 0.0
    %1751 = vmatprep.subr.mxu0 0.0
    %1752 = vmatpush1.msra.mxu0 0.0
    %1753 = vmatprep.subr.mxu0 0.0
    %1754 = vmatpush1.msra.mxu0 0.0
    %1755 = vmatprep.subr.mxu0 0.0
    %1756 = vmatpush1.msra.mxu0 0.0
    %1757 = vmatprep.subr.mxu0 0.0
    %1758 = vmatpush1.msra.mxu0 0.0
    %1759 = vmatprep.subr.mxu0 0.0
    %1760 = vmatpush1.msra.mxu0 0.0
    %1761 = vmatprep.subr.mxu0 0.0
    %1762 = vmatpush1.msra.mxu0 0.0
    %1763 = vmatprep.subr.mxu0 0.0
    %1764 = vmatpush1.msra.mxu0 0.0
    %1765 = vmatprep.subr.mxu0 0.0
    %1766 = vmatpush1.msra.mxu0 0.0
    %1767 = vmatprep.subr.mxu0 0.0
    %1768 = vmatpush1.msra.mxu0 0.0
    %1769 = vmatprep.mubr.f32.mxu0 0.0
    %v1770 = vand.u32 %v1121, 4294901760
    %1771 = vmatmul.mubr.f32.gmra.mrb[0].mxu0 %v1770
    %v1772 = vpop.f32.mrb[0].mxu0
    %v1773 = vadd.f32 %v1630, %v1772
    %v1774 = vpop.f32.mrb[0].mxu0
    %1775 = vmatprep.mubr.f32.mxu0 0.0
    %v1776 = vand.u32 %v1122, 4294901760
    %1777 = vmatmul.mubr.f32.gmra.mrb[0].mxu0 %v1776
    %v1778 = vpop.f32.mrb[0].mxu0
    %v1779 = vadd.f32 %v1638, %v1778
    %v1780 = vpop.f32.mrb[0].mxu0
    %1781 = vmatprep.mubr.f32.mxu0 0.0
    %v1782 = vand.u32 %v1123, 4294901760
    %1783 = vmatmul.mubr.f32.gmra.mrb[0].mxu0 %v1782
    %v1784 = vpop.f32.mrb[0].mxu0
    %v1785 = vadd.f32 %v1646, %v1784
    %v1786 = vpop.f32.mrb[0].mxu0
    %1787 = vmatprep.mubr.f32.mxu0 0.0
    %v1788 = vand.u32 %v1124, 4294901760
    %1789 = vmatmul.mubr.f32.gmra.mrb[0].mxu0 %v1788
    %v1790 = vpop.f32.mrb[0].mxu0
    %v1791 = vadd.f32 %v1654, %v1790
    %v1792 = vpop.f32.mrb[0].mxu0
    %1793 = vdwg.mxu0
    %1794 = vmatprep.subr.mxu0 0.0
    %v1795 = vand.u32 %v60, 4294901760
    %1796 = vmatpush1.msra.mxu0 %v1795
    %1797 = vmatprep.subr.mxu0 0.0
    %v1798 = vand.u32 %v61, 4294901760
    %1799 = vmatpush1.msra.mxu0 %v1798
    %1800 = vmatprep.subr.mxu0 0.0
    %v1801 = vand.u32 %v62, 4294901760
    %1802 = vmatpush1.msra.mxu0 %v1801
    %1803 = vmatprep.subr.mxu0 0.0
    %v1804 = vand.u32 %v63, 4294901760
    %1805 = vmatpush1.msra.mxu0 %v1804
    %1806 = vmatprep.subr.mxu0 0.0
    %v1807 = vand.u32 %v64, 4294901760
    %1808 = vmatpush1.msra.mxu0 %v1807
    %1809 = vmatprep.subr.mxu0 0.0
    %v1810 = vand.u32 %v65, 4294901760
    %1811 = vmatpush1.msra.mxu0 %v1810
    %1812 = vmatprep.subr.mxu0 0.0
    %v1813 = vand.u32 %v66, 4294901760
    %1814 = vmatpush1.msra.mxu0 %v1813
    %1815 = vmatprep.subr.mxu0 0.0
    %v1816 = vand.u32 %v67, 4294901760
    %1817 = vmatpush1.msra.mxu0 %v1816
    %1818 = vmatprep.subr.mxu0 0.0
    %v1819 = vand.u32 %v68, 4294901760
    %1820 = vmatpush1.msra.mxu0 %v1819
    %1821 = vmatprep.subr.mxu0 0.0
    %v1822 = vand.u32 %v69, 4294901760
    %1823 = vmatpush1.msra.mxu0 %v1822
    %1824 = vmatprep.subr.mxu0 0.0
    %v1825 = vand.u32 %v70, 4294901760
    %1826 = vmatpush1.msra.mxu0 %v1825
    %1827 = vmatprep.subr.mxu0 0.0
    %v1828 = vand.u32 %v71, 4294901760
    %1829 = vmatpush1.msra.mxu0 %v1828
    %1830 = vmatprep.subr.mxu0 0.0
    %v1831 = vand.u32 %v72, 4294901760
    %1832 = vmatpush1.msra.mxu0 %v1831
    %1833 = vmatprep.subr.mxu0 0.0
    %v1834 = vand.u32 %v73, 4294901760
    %1835 = vmatpush1.msra.mxu0 %v1834
    %1836 = vmatprep.subr.mxu0 0.0
    %v1837 = vand.u32 %v74, 4294901760
    %1838 = vmatpush1.msra.mxu0 %v1837
    %1839 = vmatprep.subr.mxu0 0.0
    %v1840 = vand.u32 %v75, 4294901760
    %1841 = vmatpush1.msra.mxu0 %v1840
    %1842 = vmatprep.subr.mxu0 0.0
    %1843 = vmatpush1.msra.mxu0 0.0
    %1844 = vmatprep.subr.mxu0 0.0
    %1845 = vmatpush1.msra.mxu0 0.0
    %1846 = vmatprep.subr.mxu0 0.0
    %1847 = vmatpush1.msra.mxu0 0.0
    %1848 = vmatprep.subr.mxu0 0.0
    %1849 = vmatpush1.msra.mxu0 0.0
    %1850 = vmatprep.subr.mxu0 0.0
    %1851 = vmatpush1.msra.mxu0 0.0
    %1852 = vmatprep.subr.mxu0 0.0
    %1853 = vmatpush1.msra.mxu0 0.0
    %1854 = vmatprep.subr.mxu0 0.0
    %1855 = vmatpush1.msra.mxu0 0.0
    %1856 = vmatprep.subr.mxu0 0.0
    %1857 = vmatpush1.msra.mxu0 0.0
    %1858 = vmatprep.subr.mxu0 0.0
    %1859 = vmatpush1.msra.mxu0 0.0
    %1860 = vmatprep.subr.mxu0 0.0
    %1861 = vmatpush1.msra.mxu0 0.0
    %1862 = vmatprep.subr.mxu0 0.0
    %1863 = vmatpush1.msra.mxu0 0.0
    %1864 = vmatprep.subr.mxu0 0.0
    %1865 = vmatpush1.msra.mxu0 0.0
    %1866 = vmatprep.subr.mxu0 0.0
    %1867 = vmatpush1.msra.mxu0 0.0
    %1868 = vmatprep.subr.mxu0 0.0
    %1869 = vmatpush1.msra.mxu0 0.0
    %1870 = vmatprep.subr.mxu0 0.0
    %1871 = vmatpush1.msra.mxu0 0.0
    %1872 = vmatprep.subr.mxu0 0.0
    %1873 = vmatpush1.msra.mxu0 0.0
    %1874 = vmatprep.mubr.f32.mxu0 0.0
    %v1875 = vand.u32 %v1121, 4294901760
    %1876 = vmatmul.mubr.f32.gmra.mrb[0].mxu0 %v1875
    %v1877 = vpop.f32.mrb[0].mxu0
    %v1878 = vadd.f32 %v1773, %v1877
    %v1879 = vpop.f32.mrb[0].mxu0
    %1880 = vmatprep.mubr.f32.mxu0 0.0
    %v1881 = vand.u32 %v1122, 4294901760
    %1882 = vmatmul.mubr.f32.gmra.mrb[0].mxu0 %v1881
    %v1883 = vpop.f32.mrb[0].mxu0
    %v1884 = vadd.f32 %v1779, %v1883
    %v1885 = vpop.f32.mrb[0].mxu0
    %1886 = vmatprep.mubr.f32.mxu0 0.0
    %v1887 = vand.u32 %v1123, 4294901760
    %1888 = vmatmul.mubr.f32.gmra.mrb[0].mxu0 %v1887
    %v1889 = vpop.f32.mrb[0].mxu0
    %v1890 = vadd.f32 %v1785, %v1889
    %v1891 = vpop.f32.mrb[0].mxu0
    %1892 = vmatprep.mubr.f32.mxu0 0.0
    %v1893 = vand.u32 %v1124, 4294901760
    %1894 = vmatmul.mubr.f32.gmra.mrb[0].mxu0 %v1893
    %v1895 = vpop.f32.mrb[0].mxu0
    %v1896 = vadd.f32 %v1791, %v1895
    %v1897 = vpop.f32.mrb[0].mxu0
    %1898 = vdwg.mxu0
    %v1899 = vadd.f32 %v1878, %v40
    %v1900 = vadd.f32 %v1884, %v41
    %v1901 = vadd.f32 %v1890, %v42
    %v1902 = vadd.f32 %v1896, %v43
    %1903 = vst [vmem:[#allocation7] sm:$0xff] %v1899
    %1904 = vst [vmem:[#allocation7 + $0x8] sm:$0xff] %v1900
    %1905 = vst [vmem:[#allocation7 + $0x10] sm:$0xff] %v1901
    %1906 = vst [vmem:[#allocation7 + $0x18] sm:$0xff] %v1902
    // Predicated region
    $region18: #{tpu_custom_call.1} parent=1 // pred_check
      _
    $region19: #{tpu_custom_call.1} parent=1 // pred_check_branch
      %1908 = sbr.rel (0) target = $region21
    $region20: #{tpu_custom_call.1} parent=1 // pred_region
      %s1910 = ssub.s32 512, 512
      %1911 = vsyncadd [#allocation4], %s1910
      %s1912 = sshll.u32 [#allocation7], 4
      %s1913 = int_to_ptr.vmem [resolvable:$true] %s1912
      %1918 = dma.vmem_to_hbm [thread:$0]  %s1913, 512, %s2, [#allocation4], 128, 128, 8
    $region21: #{tpu_custom_call.1} parent=1 // pred_fallthru
      _
    // Predicated region
    $region22: #{tpu_custom_call.1} parent=1 // pred_check
      _
    $region23: #{tpu_custom_call.1} parent=1 // pred_check_branch
      %1920 = sbr.rel (0) target = $region25
    $region24: #{tpu_custom_call.1} parent=1 // pred_region
      %1921 = dma.done [#allocation4], 512
    $region25: #{tpu_custom_call.1} parent=1 // pred_fallthru
      _
    %1922 = vsyncpa [#allocation3], 1
    %1923 = vsyncpa [#allocation6], 1
    %1924 = vsyncpa [#allocation4], 1

</llo_original>
